<compile_context>
chip_gen: v6e
topology: v6e:2x2x1
jax: 0.10.0
libtpu: 0.0.40
codegen_flags: <defaults>
</compile_context>

<pallas_src>
import jax
import jax.numpy as jnp
from jax.experimental import pallas as pl
from jax.experimental.pallas import tpu as pltpu

SEED_SIZE = 16      # Consts.seed_size
NUM_FEATURES = 4    # Consts.num_features
COMP_LENGTH = 12    # Consts.comp_length
BATCH = 2

K1, K2, K3, K4 = 32, 24, 20, 8   # conv kernel sizes from the module
F32 = jnp.float32


def _leaky(x, slope=0.2):
    return jnp.where(x > 0, x, slope * x)


# -----------------------------------------------------------------------------
# In-kernel layout helpers: only static 2-D slices / concatenations / 2-D dots.
# -----------------------------------------------------------------------------
def _gather_cm(z, bsz, nch, length):
    """Row-major 2-D view `z` of the torch tensor (bsz, nch, length)
    -> channels-major (nch, bsz*length)."""
    ncols = z.shape[1]
    rows = []
    for c in range(nch):
        segs = []
        for b in range(bsz):
            flat = (b * nch + c) * length           # contiguous run of `length`
            r, q = flat // ncols, flat % ncols      # never crosses a row (ncols % length == 0)
            segs.append(z[r:r + 1, q:q + length])
        rows.append(jnp.concatenate(segs, axis=1))
    return jnp.concatenate(rows, axis=0)            # (nch, bsz*length)


def _scatter_rows(cm, bsz, length, row_len):
    """Channels-major (nch, bsz*length) -> row-major 2-D view
    (bsz*nch*length // row_len, row_len) of the torch tensor (bsz, nch, length)."""
    nch = cm.shape[0]
    nrows = bsz * nch * length // row_len
    buckets = [[] for _ in range(nrows)]
    for b in range(bsz):
        for c in range(nch):                        # increasing c => increasing column
            flat = (b * nch + c) * length
            buckets[flat // row_len].append(cm[c:c + 1, b * length:(b + 1) * length])
    return jnp.concatenate([jnp.concatenate(seg, axis=1) for seg in buckets], axis=0)


def _conv1d_same_cm(x_cm, w2d, bias, k, bsz, length):
    """PyTorch Conv1d (cross-correlation, stride 1, padding='same', zeros) on a
    channels-major activation, via im2col + one MXU matmul.

    x_cm : (Cin, bsz*length)                    w2d : (Cout, k*Cin), col = t*Cin + c
    bias : (Cout, 1)                            returns (Cout, bsz*length)
    """
    cin = x_cm.shape[0]
    pad_l = (k - 1) // 2
    pad_r = (k - 1) - pad_l
    per_batch = []
    for b in range(bsz):   # layout plumbing only; the matmul below covers the batch
        seg = x_cm[:, b * length:(b + 1) * length]
        xp = jnp.concatenate(
            [jnp.zeros((cin, pad_l), F32), seg, jnp.zeros((cin, pad_r), F32)],
            axis=1)                                                # (Cin, L+K-1)
        per_batch.append(jnp.concatenate(
            [xp[:, t:t + length] for t in range(k)], axis=0))      # (K*Cin, L)
    patches = jnp.concatenate(per_batch, axis=1)                   # (K*Cin, B*L)
    return jnp.dot(w2d, patches, preferred_element_type=F32) + bias


# -----------------------------------------------------------------------------
# Fused kernel: fc1 -> bn1 -> conv1 -> fc2 -> conv2 -> fc3 -> conv3 -> fc4
#               -> conv4 -> maxpool -> fc5        (everything VMEM-resident)
# -----------------------------------------------------------------------------
def generator_kernel(x_ref, w1a_ref, w1b_ref, gamma_ref, beta_ref,
                     c1w_ref, c1b_ref, w2_ref, c2w_ref, c2b_ref,
                     c3w_ref, c3b_ref, c4w_ref, c4b_ref, w5_ref, o_ref):
    nf, L = NUM_FEATURES, COMP_LENGTH
    bsz = x_ref.shape[0]

    # fc1: Linear(S, 2S, no bias) -> LeakyReLU(0.2) -> Linear(2S, 3S, no bias)
    h = _leaky(jnp.dot(x_ref[...], w1a_ref[...], preferred_element_type=F32))
    y = jnp.dot(h, w1b_ref[...], preferred_element_type=F32)        # (B, 3S)

    # torch: reshape(-1, nf, L)   ->  channels-major (nf, B*L)
    y = _gather_cm(y, bsz, nf, L)

    # bn1: BatchNorm1d(nf), training-mode batch statistics, eps=1e-5.
    # TODO(synk): running_mean/running_var update (a training side effect) is
    # not reproduced; only the normalization math is.
    n = bsz * L
    mean = jnp.sum(y, axis=1, keepdims=True) / n                    # (nf, 1)
    xc = y - mean
    var = jnp.sum(xc * xc, axis=1, keepdims=True) / n               # biased (torch)
    y = xc * jax.lax.rsqrt(var + 1e-5) * gamma_ref[...] + beta_ref[...]

    # conv1: nf -> 2nf, K1, 'same'
    y = _conv1d_same_cm(y, c1w_ref[...], c1b_ref[...], K1, bsz, L)  # (2nf, B*L)

    # torch: reshape(-1, nf*L) on (B, 2nf, L)  ->  (2B, nf*L)
    z = _scatter_rows(y, bsz, L, nf * L)

    # fc2: Linear(nf*L, nf*L, no bias) -> LeakyReLU(0.2)
    z = _leaky(jnp.dot(z, w2_ref[...], preferred_element_type=F32))

    # torch: reshape(-1, 2nf, L)  ->  channels-major (2nf, B*L)
    y = _gather_cm(z, bsz, 2 * nf, L)

    # conv2 -> fc3(LeakyReLU) -> conv3 -> fc4(LeakyReLU) -> conv4
    # (the reshape round-trips in the module are identities on the tensor and
    #  LeakyReLU is elementwise, so the channels-major layout is kept throughout)
    y = _conv1d_same_cm(y, c2w_ref[...], c2b_ref[...], K2, bsz, L)  # (3nf, B*L)
    y = _leaky(y)                                                   # fc3
    y = _conv1d_same_cm(y, c3w_ref[...], c3b_ref[...], K3, bsz, L)  # (4nf, B*L)
    y = _leaky(y)                                                   # fc4
    y = _conv1d_same_cm(y, c4w_ref[...], c4b_ref[...], K4, bsz, L)  # (nf*nf, B*L)

    # mp4: MaxPool1d(nf), kernel = stride = nf.  Pool directly on (C, B*L):
    # windows never straddle a batch boundary since L % nf == 0.
    nwin = bsz * (L // nf)
    y = jnp.concatenate(
        [jnp.max(y[:, j * nf:(j + 1) * nf], axis=1, keepdims=True)
         for j in range(nwin)], axis=1)                             # (nf*nf, B*(L//nf))

    # torch: reshape(-1, nf*L) on (B, nf*nf, L//nf)  ->  (B, nf*L)
    z = _scatter_rows(y, bsz, L // nf, nf * L)

    # fc5: LeakyReLU(0.2) -> Linear(nf*L, nf*L, no bias); single dense store.
    o_ref[...] = jnp.dot(_leaky(z), w5_ref[...], preferred_element_type=F32)


# -----------------------------------------------------------------------------
# Wrapper / params
# -----------------------------------------------------------------------------
def generator_forward(x, p):
    bsz = x.shape[0]
    args = (x, p['w1a'], p['w1b'], p['bn_gamma'], p['bn_beta'],
            p['c1_w'], p['c1_b'], p['w2'], p['c2_w'], p['c2_b'],
            p['c3_w'], p['c3_b'], p['c4_w'], p['c4_b'], p['w5'])
    return pl.pallas_call(
        generator_kernel,
        out_shape=jax.ShapeDtypeStruct((bsz, NUM_FEATURES * COMP_LENGTH), F32),
        in_specs=[pl.BlockSpec(memory_space=pltpu.MemorySpace.VMEM)] * len(args),
        out_specs=pl.BlockSpec(memory_space=pltpu.MemorySpace.VMEM),
    )(*args)


def init_params(key):
    nf, length, s = NUM_FEATURES, COMP_LENGTH, SEED_SIZE
    ks = jax.random.split(key, 12)

    def lin(k, fan_in, fan_out):
        # stored already transposed to (in, out) so kernels do x @ w
        return jax.random.normal(k, (fan_in, fan_out), F32) / jnp.sqrt(fan_in)

    def conv_w(k, ksize, cout, cin):
        # torch layout (Cout, Cin, K) -> im2col layout (Cout, K*Cin),
        # column index = t*Cin + c (matches the in-kernel patch row order).
        w = jax.random.normal(k, (cout, cin, ksize), F32) / jnp.sqrt(cin * ksize)
        return jnp.transpose(w, (0, 2, 1)).reshape(cout, ksize * cin)

    def conv_b(k, cout):
        return 0.01 * jax.random.normal(k, (cout, 1), F32)

    return dict(
        w1a=lin(ks[0], s, 2 * s),
        w1b=lin(ks[1], 2 * s, 3 * s),
        bn_gamma=jnp.ones((nf, 1), F32),   # BatchNorm1d default init
        bn_beta=jnp.zeros((nf, 1), F32),
        c1_w=conv_w(ks[2], K1, 2 * nf, nf),
        c1_b=conv_b(ks[3], 2 * nf),
        w2=lin(ks[4], nf * length, nf * length),
        c2_w=conv_w(ks[5], K2, 3 * nf, 2 * nf),
        c2_b=conv_b(ks[6], 3 * nf),
        c3_w=conv_w(ks[7], K3, 4 * nf, 3 * nf),
        c3_b=conv_b(ks[8], 4 * nf),
        c4_w=conv_w(ks[9], K4, nf * nf, 4 * nf),
        c4_b=conv_b(ks[10], nf * nf),
        w5=lin(ks[11], nf * length, nf * length),
    )


if __name__ == "__main__":
    key = jax.random.PRNGKey(0)
    kx, kp = jax.random.split(key)
    x = jax.random.normal(kx, (BATCH, SEED_SIZE), F32)
    params = init_params(kp)

    fwd = jax.jit(generator_forward)
    out = jax.block_until_ready(fwd(x, params))

    assert out.shape == (BATCH, NUM_FEATURES * COMP_LENGTH), out.shape
    assert bool(jnp.all(jnp.isfinite(out)))
    print("KERNEL_OK")
</pallas_src>

<mosaic_0001>
module attributes {stable_mosaic.version = 11 : i64} {
  func.func @generator_kernel(%arg0: memref<2x16xf32, #tpu.memory_space<vmem>>, %arg1: memref<16x32xf32, #tpu.memory_space<vmem>>, %arg2: memref<32x48xf32, #tpu.memory_space<vmem>>, %arg3: memref<4x1xf32, #tpu.memory_space<vmem>>, %arg4: memref<4x1xf32, #tpu.memory_space<vmem>>, %arg5: memref<8x128xf32, #tpu.memory_space<vmem>>, %arg6: memref<8x1xf32, #tpu.memory_space<vmem>>, %arg7: memref<48x48xf32, #tpu.memory_space<vmem>>, %arg8: memref<12x192xf32, #tpu.memory_space<vmem>>, %arg9: memref<12x1xf32, #tpu.memory_space<vmem>>, %arg10: memref<16x240xf32, #tpu.memory_space<vmem>>, %arg11: memref<16x1xf32, #tpu.memory_space<vmem>>, %arg12: memref<16x128xf32, #tpu.memory_space<vmem>>, %arg13: memref<16x1xf32, #tpu.memory_space<vmem>>, %arg14: memref<48x48xf32, #tpu.memory_space<vmem>>, %arg15: memref<2x48xf32, #tpu.memory_space<vmem>>) attributes {dimension_semantics = [], scalar_prefetch = 0 : i64, scratch_operands = 0 : i64, tpu.core_type = #tpu.core_type<tc>} {
    %c0 = arith.constant 0 : index
    %c0_0 = arith.constant 0 : index
    %0 = vector.load %arg0[%c0, %c0_0] : memref<2x16xf32, #tpu.memory_space<vmem>>, vector<2x16xf32>
    %c0_1 = arith.constant 0 : index
    %c0_2 = arith.constant 0 : index
    %1 = vector.load %arg1[%c0_1, %c0_2] : memref<16x32xf32, #tpu.memory_space<vmem>>, vector<16x32xf32>
    %cst = arith.constant dense<0.000000e+00> : vector<2x32xf32>
    %2 = tpu.matmul %0, %1, %cst {dimension_numbers = #tpu.dot_dimension_numbers<[1], [0], [0], [1], [0, 0, 1, 1], [], []>} : vector<2x16xf32>, vector<16x32xf32>, vector<2x32xf32> -> vector<2x32xf32>
    %cst_3 = arith.constant 0.000000e+00 : f32
    %3 = vector.broadcast %cst_3 : f32 to vector<2x32xf32>
    %4 = arith.cmpf ogt, %2, %3 : vector<2x32xf32>
    %cst_4 = arith.constant 2.000000e-01 : f32
    %5 = vector.broadcast %cst_4 : f32 to vector<2x32xf32>
    %6 = arith.mulf %5, %2 : vector<2x32xf32>
    %7 = arith.select %4, %2, %6 : vector<2x32xi1>, vector<2x32xf32>
    %c0_5 = arith.constant 0 : index
    %c0_6 = arith.constant 0 : index
    %8 = vector.load %arg2[%c0_5, %c0_6] : memref<32x48xf32, #tpu.memory_space<vmem>>, vector<32x48xf32>
    %cst_7 = arith.constant dense<0.000000e+00> : vector<2x48xf32>
    %9 = tpu.matmul %7, %8, %cst_7 {dimension_numbers = #tpu.dot_dimension_numbers<[1], [0], [0], [1], [0, 0, 1, 1], [], []>} : vector<2x32xf32>, vector<32x48xf32>, vector<2x48xf32> -> vector<2x48xf32>
    %10 = vector.extract_strided_slice %9 {offsets = [0, 0], sizes = [1, 12], strides = [1, 1]} : vector<2x48xf32> to vector<1x12xf32>
    %11 = vector.extract_strided_slice %9 {offsets = [1, 0], sizes = [1, 12], strides = [1, 1]} : vector<2x48xf32> to vector<1x12xf32>
    %12 = tpu.concatenate %10, %11 in 1 : vector<1x12xf32>, vector<1x12xf32> -> vector<1x24xf32>
    %13 = vector.extract_strided_slice %9 {offsets = [0, 12], sizes = [1, 12], strides = [1, 1]} : vector<2x48xf32> to vector<1x12xf32>
    %14 = vector.extract_strided_slice %9 {offsets = [1, 12], sizes = [1, 12], strides = [1, 1]} : vector<2x48xf32> to vector<1x12xf32>
    %15 = tpu.concatenate %13, %14 in 1 : vector<1x12xf32>, vector<1x12xf32> -> vector<1x24xf32>
    %16 = vector.extract_strided_slice %9 {offsets = [0, 24], sizes = [1, 12], strides = [1, 1]} : vector<2x48xf32> to vector<1x12xf32>
    %17 = vector.extract_strided_slice %9 {offsets = [1, 24], sizes = [1, 12], strides = [1, 1]} : vector<2x48xf32> to vector<1x12xf32>
    %18 = tpu.concatenate %16, %17 in 1 : vector<1x12xf32>, vector<1x12xf32> -> vector<1x24xf32>
    %19 = vector.extract_strided_slice %9 {offsets = [0, 36], sizes = [1, 12], strides = [1, 1]} : vector<2x48xf32> to vector<1x12xf32>
    %20 = vector.extract_strided_slice %9 {offsets = [1, 36], sizes = [1, 12], strides = [1, 1]} : vector<2x48xf32> to vector<1x12xf32>
    %21 = tpu.concatenate %19, %20 in 1 : vector<1x12xf32>, vector<1x12xf32> -> vector<1x24xf32>
    %22 = tpu.concatenate %12, %15, %18, %21 in 0 : vector<1x24xf32>, vector<1x24xf32>, vector<1x24xf32>, vector<1x24xf32> -> vector<4x24xf32>
    %cst_8 = arith.constant dense<0.000000e+00> : vector<4xf32>
    %23 = vector.multi_reduction <add>, %22, %cst_8 [1] : vector<4x24xf32> to vector<4xf32>
    %24 = vector.shape_cast %23 : vector<4xf32> to vector<4x1xf32>
    %cst_9 = arith.constant 2.400000e+01 : f32
    %25 = vector.broadcast %cst_9 : f32 to vector<4x1xf32>
    %26 = arith.divf %24, %25 : vector<4x1xf32>
    %27 = vector.broadcast %26 : vector<4x1xf32> to vector<4x24xf32>
    %28 = arith.subf %22, %27 : vector<4x24xf32>
    %29 = arith.mulf %28, %28 : vector<4x24xf32>
    %cst_10 = arith.constant dense<0.000000e+00> : vector<4xf32>
    %30 = vector.multi_reduction <add>, %29, %cst_10 [1] : vector<4x24xf32> to vector<4xf32>
    %31 = vector.shape_cast %30 : vector<4xf32> to vector<4x1xf32>
    %cst_11 = arith.constant 2.400000e+01 : f32
    %32 = vector.broadcast %cst_11 : f32 to vector<4x1xf32>
    %33 = arith.divf %31, %32 : vector<4x1xf32>
    %cst_12 = arith.constant 9.99999974E-6 : f32
    %34 = vector.broadcast %cst_12 : f32 to vector<4x1xf32>
    %35 = arith.addf %33, %34 : vector<4x1xf32>
    %36 = math.rsqrt %35 : vector<4x1xf32>
    %37 = vector.broadcast %36 : vector<4x1xf32> to vector<4x24xf32>
    %38 = arith.mulf %28, %37 : vector<4x24xf32>
    %c0_13 = arith.constant 0 : index
    %c0_14 = arith.constant 0 : index
    %39 = vector.load %arg3[%c0_13, %c0_14] : memref<4x1xf32, #tpu.memory_space<vmem>>, vector<4x1xf32>
    %40 = vector.broadcast %39 : vector<4x1xf32> to vector<4x24xf32>
    %41 = arith.mulf %38, %40 : vector<4x24xf32>
    %c0_15 = arith.constant 0 : index
    %c0_16 = arith.constant 0 : index
    %42 = vector.load %arg4[%c0_15, %c0_16] : memref<4x1xf32, #tpu.memory_space<vmem>>, vector<4x1xf32>
    %43 = vector.broadcast %42 : vector<4x1xf32> to vector<4x24xf32>
    %44 = arith.addf %41, %43 : vector<4x24xf32>
    %c0_17 = arith.constant 0 : index
    %c0_18 = arith.constant 0 : index
    %45 = vector.load %arg5[%c0_17, %c0_18] : memref<8x128xf32, #tpu.memory_space<vmem>>, vector<8x128xf32>
    %c0_19 = arith.constant 0 : index
    %c0_20 = arith.constant 0 : index
    %46 = vector.load %arg6[%c0_19, %c0_20] : memref<8x1xf32, #tpu.memory_space<vmem>>, vector<8x1xf32>
    %47 = vector.extract_strided_slice %44 {offsets = [0, 0], sizes = [4, 12], strides = [1, 1]} : vector<4x24xf32> to vector<4x12xf32>
    %cst_21 = arith.constant 0.000000e+00 : f32
    %48 = vector.broadcast %cst_21 : f32 to vector<4x15xf32>
    %cst_22 = arith.constant 0.000000e+00 : f32
    %49 = vector.broadcast %cst_22 : f32 to vector<4x16xf32>
    %50 = tpu.concatenate %48, %47, %49 in 1 : vector<4x15xf32>, vector<4x12xf32>, vector<4x16xf32> -> vector<4x43xf32>
    %51 = vector.extract_strided_slice %50 {offsets = [0, 0], sizes = [4, 12], strides = [1, 1]} : vector<4x43xf32> to vector<4x12xf32>
    %52 = vector.extract_strided_slice %50 {offsets = [0, 1], sizes = [4, 12], strides = [1, 1]} : vector<4x43xf32> to vector<4x12xf32>
    %53 = vector.extract_strided_slice %50 {offsets = [0, 2], sizes = [4, 12], strides = [1, 1]} : vector<4x43xf32> to vector<4x12xf32>
    %54 = vector.extract_strided_slice %50 {offsets = [0, 3], sizes = [4, 12], strides = [1, 1]} : vector<4x43xf32> to vector<4x12xf32>
    %55 = vector.extract_strided_slice %50 {offsets = [0, 4], sizes = [4, 12], strides = [1, 1]} : vector<4x43xf32> to vector<4x12xf32>
    %56 = vector.extract_strided_slice %50 {offsets = [0, 5], sizes = [4, 12], strides = [1, 1]} : vector<4x43xf32> to vector<4x12xf32>
    %57 = vector.extract_strided_slice %50 {offsets = [0, 6], sizes = [4, 12], strides = [1, 1]} : vector<4x43xf32> to vector<4x12xf32>
    %58 = vector.extract_strided_slice %50 {offsets = [0, 7], sizes = [4, 12], strides = [1, 1]} : vector<4x43xf32> to vector<4x12xf32>
    %59 = vector.extract_strided_slice %50 {offsets = [0, 8], sizes = [4, 12], strides = [1, 1]} : vector<4x43xf32> to vector<4x12xf32>
    %60 = vector.extract_strided_slice %50 {offsets = [0, 9], sizes = [4, 12], strides = [1, 1]} : vector<4x43xf32> to vector<4x12xf32>
    %61 = vector.extract_strided_slice %50 {offsets = [0, 10], sizes = [4, 12], strides = [1, 1]} : vector<4x43xf32> to vector<4x12xf32>
    %62 = vector.extract_strided_slice %50 {offsets = [0, 11], sizes = [4, 12], strides = [1, 1]} : vector<4x43xf32> to vector<4x12xf32>
    %63 = vector.extract_strided_slice %50 {offsets = [0, 12], sizes = [4, 12], strides = [1, 1]} : vector<4x43xf32> to vector<4x12xf32>
    %64 = vector.extract_strided_slice %50 {offsets = [0, 13], sizes = [4, 12], strides = [1, 1]} : vector<4x43xf32> to vector<4x12xf32>
    %65 = vector.extract_strided_slice %50 {offsets = [0, 14], sizes = [4, 12], strides = [1, 1]} : vector<4x43xf32> to vector<4x12xf32>
    %66 = vector.extract_strided_slice %50 {offsets = [0, 15], sizes = [4, 12], strides = [1, 1]} : vector<4x43xf32> to vector<4x12xf32>
    %67 = vector.extract_strided_slice %50 {offsets = [0, 16], sizes = [4, 12], strides = [1, 1]} : vector<4x43xf32> to vector<4x12xf32>
    %68 = vector.extract_strided_slice %50 {offsets = [0, 17], sizes = [4, 12], strides = [1, 1]} : vector<4x43xf32> to vector<4x12xf32>
    %69 = vector.extract_strided_slice %50 {offsets = [0, 18], sizes = [4, 12], strides = [1, 1]} : vector<4x43xf32> to vector<4x12xf32>
    %70 = vector.extract_strided_slice %50 {offsets = [0, 19], sizes = [4, 12], strides = [1, 1]} : vector<4x43xf32> to vector<4x12xf32>
    %71 = vector.extract_strided_slice %50 {offsets = [0, 20], sizes = [4, 12], strides = [1, 1]} : vector<4x43xf32> to vector<4x12xf32>
    %72 = vector.extract_strided_slice %50 {offsets = [0, 21], sizes = [4, 12], strides = [1, 1]} : vector<4x43xf32> to vector<4x12xf32>
    %73 = vector.extract_strided_slice %50 {offsets = [0, 22], sizes = [4, 12], strides = [1, 1]} : vector<4x43xf32> to vector<4x12xf32>
    %74 = vector.extract_strided_slice %50 {offsets = [0, 23], sizes = [4, 12], strides = [1, 1]} : vector<4x43xf32> to vector<4x12xf32>
    %75 = vector.extract_strided_slice %50 {offsets = [0, 24], sizes = [4, 12], strides = [1, 1]} : vector<4x43xf32> to vector<4x12xf32>
    %76 = vector.extract_strided_slice %50 {offsets = [0, 25], sizes = [4, 12], strides = [1, 1]} : vector<4x43xf32> to vector<4x12xf32>
    %77 = vector.extract_strided_slice %50 {offsets = [0, 26], sizes = [4, 12], strides = [1, 1]} : vector<4x43xf32> to vector<4x12xf32>
    %78 = vector.extract_strided_slice %50 {offsets = [0, 27], sizes = [4, 12], strides = [1, 1]} : vector<4x43xf32> to vector<4x12xf32>
    %79 = vector.extract_strided_slice %50 {offsets = [0, 28], sizes = [4, 12], strides = [1, 1]} : vector<4x43xf32> to vector<4x12xf32>
    %80 = vector.extract_strided_slice %50 {offsets = [0, 29], sizes = [4, 12], strides = [1, 1]} : vector<4x43xf32> to vector<4x12xf32>
    %81 = vector.extract_strided_slice %50 {offsets = [0, 30], sizes = [4, 12], strides = [1, 1]} : vector<4x43xf32> to vector<4x12xf32>
    %82 = vector.extract_strided_slice %50 {offsets = [0, 31], sizes = [4, 12], strides = [1, 1]} : vector<4x43xf32> to vector<4x12xf32>
    %83 = tpu.concatenate %51, %52, %53, %54, %55, %56, %57, %58, %59, %60, %61, %62, %63, %64, %65, %66 in 0 : vector<4x12xf32>, vector<4x12xf32>, vector<4x12xf32>, vector<4x12xf32>, vector<4x12xf32>, vector<4x12xf32>, vector<4x12xf32>, vector<4x12xf32>, vector<4x12xf32>, vector<4x12xf32>, vector<4x12xf32>, vector<4x12xf32>, vector<4x12xf32>, vector<4x12xf32>, vector<4x12xf32>, vector<4x12xf32> -> vector<64x12xf32>
    %84 = tpu.concatenate %67, %68, %69, %70, %71, %72, %73, %74, %75, %76, %77, %78, %79, %80, %81, %82 in 0 : vector<4x12xf32>, vector<4x12xf32>, vector<4x12xf32>, vector<4x12xf32>, vector<4x12xf32>, vector<4x12xf32>, vector<4x12xf32>, vector<4x12xf32>, vector<4x12xf32>, vector<4x12xf32>, vector<4x12xf32>, vector<4x12xf32>, vector<4x12xf32>, vector<4x12xf32>, vector<4x12xf32>, vector<4x12xf32> -> vector<64x12xf32>
    %85 = tpu.concatenate %83, %84 in 0 : vector<64x12xf32>, vector<64x12xf32> -> vector<128x12xf32>
    %86 = vector.extract_strided_slice %44 {offsets = [0, 12], sizes = [4, 12], strides = [1, 1]} : vector<4x24xf32> to vector<4x12xf32>
    %cst_23 = arith.constant 0.000000e+00 : f32
    %87 = vector.broadcast %cst_23 : f32 to vector<4x15xf32>
    %cst_24 = arith.constant 0.000000e+00 : f32
    %88 = vector.broadcast %cst_24 : f32 to vector<4x16xf32>
    %89 = tpu.concatenate %87, %86, %88 in 1 : vector<4x15xf32>, vector<4x12xf32>, vector<4x16xf32> -> vector<4x43xf32>
    %90 = vector.extract_strided_slice %89 {offsets = [0, 0], sizes = [4, 12], strides = [1, 1]} : vector<4x43xf32> to vector<4x12xf32>
    %91 = vector.extract_strided_slice %89 {offsets = [0, 1], sizes = [4, 12], strides = [1, 1]} : vector<4x43xf32> to vector<4x12xf32>
    %92 = vector.extract_strided_slice %89 {offsets = [0, 2], sizes = [4, 12], strides = [1, 1]} : vector<4x43xf32> to vector<4x12xf32>
    %93 = vector.extract_strided_slice %89 {offsets = [0, 3], sizes = [4, 12], strides = [1, 1]} : vector<4x43xf32> to vector<4x12xf32>
    %94 = vector.extract_strided_slice %89 {offsets = [0, 4], sizes = [4, 12], strides = [1, 1]} : vector<4x43xf32> to vector<4x12xf32>
    %95 = vector.extract_strided_slice %89 {offsets = [0, 5], sizes = [4, 12], strides = [1, 1]} : vector<4x43xf32> to vector<4x12xf32>
    %96 = vector.extract_strided_slice %89 {offsets = [0, 6], sizes = [4, 12], strides = [1, 1]} : vector<4x43xf32> to vector<4x12xf32>
    %97 = vector.extract_strided_slice %89 {offsets = [0, 7], sizes = [4, 12], strides = [1, 1]} : vector<4x43xf32> to vector<4x12xf32>
    %98 = vector.extract_strided_slice %89 {offsets = [0, 8], sizes = [4, 12], strides = [1, 1]} : vector<4x43xf32> to vector<4x12xf32>
    %99 = vector.extract_strided_slice %89 {offsets = [0, 9], sizes = [4, 12], strides = [1, 1]} : vector<4x43xf32> to vector<4x12xf32>
    %100 = vector.extract_strided_slice %89 {offsets = [0, 10], sizes = [4, 12], strides = [1, 1]} : vector<4x43xf32> to vector<4x12xf32>
    %101 = vector.extract_strided_slice %89 {offsets = [0, 11], sizes = [4, 12], strides = [1, 1]} : vector<4x43xf32> to vector<4x12xf32>
    %102 = vector.extract_strided_slice %89 {offsets = [0, 12], sizes = [4, 12], strides = [1, 1]} : vector<4x43xf32> to vector<4x12xf32>
    %103 = vector.extract_strided_slice %89 {offsets = [0, 13], sizes = [4, 12], strides = [1, 1]} : vector<4x43xf32> to vector<4x12xf32>
    %104 = vector.extract_strided_slice %89 {offsets = [0, 14], sizes = [4, 12], strides = [1, 1]} : vector<4x43xf32> to vector<4x12xf32>
    %105 = vector.extract_strided_slice %89 {offsets = [0, 15], sizes = [4, 12], strides = [1, 1]} : vector<4x43xf32> to vector<4x12xf32>
    %106 = vector.extract_strided_slice %89 {offsets = [0, 16], sizes = [4, 12], strides = [1, 1]} : vector<4x43xf32> to vector<4x12xf32>
    %107 = vector.extract_strided_slice %89 {offsets = [0, 17], sizes = [4, 12], strides = [1, 1]} : vector<4x43xf32> to vector<4x12xf32>
    %108 = vector.extract_strided_slice %89 {offsets = [0, 18], sizes = [4, 12], strides = [1, 1]} : vector<4x43xf32> to vector<4x12xf32>
    %109 = vector.extract_strided_slice %89 {offsets = [0, 19], sizes = [4, 12], strides = [1, 1]} : vector<4x43xf32> to vector<4x12xf32>
    %110 = vector.extract_strided_slice %89 {offsets = [0, 20], sizes = [4, 12], strides = [1, 1]} : vector<4x43xf32> to vector<4x12xf32>
    %111 = vector.extract_strided_slice %89 {offsets = [0, 21], sizes = [4, 12], strides = [1, 1]} : vector<4x43xf32> to vector<4x12xf32>
    %112 = vector.extract_strided_slice %89 {offsets = [0, 22], sizes = [4, 12], strides = [1, 1]} : vector<4x43xf32> to vector<4x12xf32>
    %113 = vector.extract_strided_slice %89 {offsets = [0, 23], sizes = [4, 12], strides = [1, 1]} : vector<4x43xf32> to vector<4x12xf32>
    %114 = vector.extract_strided_slice %89 {offsets = [0, 24], sizes = [4, 12], strides = [1, 1]} : vector<4x43xf32> to vector<4x12xf32>
    %115 = vector.extract_strided_slice %89 {offsets = [0, 25], sizes = [4, 12], strides = [1, 1]} : vector<4x43xf32> to vector<4x12xf32>
    %116 = vector.extract_strided_slice %89 {offsets = [0, 26], sizes = [4, 12], strides = [1, 1]} : vector<4x43xf32> to vector<4x12xf32>
    %117 = vector.extract_strided_slice %89 {offsets = [0, 27], sizes = [4, 12], strides = [1, 1]} : vector<4x43xf32> to vector<4x12xf32>
    %118 = vector.extract_strided_slice %89 {offsets = [0, 28], sizes = [4, 12], strides = [1, 1]} : vector<4x43xf32> to vector<4x12xf32>
    %119 = vector.extract_strided_slice %89 {offsets = [0, 29], sizes = [4, 12], strides = [1, 1]} : vector<4x43xf32> to vector<4x12xf32>
    %120 = vector.extract_strided_slice %89 {offsets = [0, 30], sizes = [4, 12], strides = [1, 1]} : vector<4x43xf32> to vector<4x12xf32>
    %121 = vector.extract_strided_slice %89 {offsets = [0, 31], sizes = [4, 12], strides = [1, 1]} : vector<4x43xf32> to vector<4x12xf32>
    %122 = tpu.concatenate %90, %91, %92, %93, %94, %95, %96, %97, %98, %99, %100, %101, %102, %103, %104, %105 in 0 : vector<4x12xf32>, vector<4x12xf32>, vector<4x12xf32>, vector<4x12xf32>, vector<4x12xf32>, vector<4x12xf32>, vector<4x12xf32>, vector<4x12xf32>, vector<4x12xf32>, vector<4x12xf32>, vector<4x12xf32>, vector<4x12xf32>, vector<4x12xf32>, vector<4x12xf32>, vector<4x12xf32>, vector<4x12xf32> -> vector<64x12xf32>
    %123 = tpu.concatenate %106, %107, %108, %109, %110, %111, %112, %113, %114, %115, %116, %117, %118, %119, %120, %121 in 0 : vector<4x12xf32>, vector<4x12xf32>, vector<4x12xf32>, vector<4x12xf32>, vector<4x12xf32>, vector<4x12xf32>, vector<4x12xf32>, vector<4x12xf32>, vector<4x12xf32>, vector<4x12xf32>, vector<4x12xf32>, vector<4x12xf32>, vector<4x12xf32>, vector<4x12xf32>, vector<4x12xf32>, vector<4x12xf32> -> vector<64x12xf32>
    %124 = tpu.concatenate %122, %123 in 0 : vector<64x12xf32>, vector<64x12xf32> -> vector<128x12xf32>
    %125 = tpu.concatenate %85, %124 in 1 : vector<128x12xf32>, vector<128x12xf32> -> vector<128x24xf32>
    %cst_25 = arith.constant dense<0.000000e+00> : vector<8x24xf32>
    %126 = tpu.matmul %45, %125, %cst_25 {dimension_numbers = #tpu.dot_dimension_numbers<[1], [0], [0], [1], [0, 0, 1, 1], [], []>} : vector<8x128xf32>, vector<128x24xf32>, vector<8x24xf32> -> vector<8x24xf32>
    %127 = vector.broadcast %46 : vector<8x1xf32> to vector<8x24xf32>
    %128 = arith.addf %126, %127 : vector<8x24xf32>
    %129 = vector.extract_strided_slice %128 {offsets = [0, 0], sizes = [1, 12], strides = [1, 1]} : vector<8x24xf32> to vector<1x12xf32>
    %130 = vector.extract_strided_slice %128 {offsets = [1, 0], sizes = [1, 12], strides = [1, 1]} : vector<8x24xf32> to vector<1x12xf32>
    %131 = vector.extract_strided_slice %128 {offsets = [2, 0], sizes = [1, 12], strides = [1, 1]} : vector<8x24xf32> to vector<1x12xf32>
    %132 = vector.extract_strided_slice %128 {offsets = [3, 0], sizes = [1, 12], strides = [1, 1]} : vector<8x24xf32> to vector<1x12xf32>
    %133 = vector.extract_strided_slice %128 {offsets = [4, 0], sizes = [1, 12], strides = [1, 1]} : vector<8x24xf32> to vector<1x12xf32>
    %134 = vector.extract_strided_slice %128 {offsets = [5, 0], sizes = [1, 12], strides = [1, 1]} : vector<8x24xf32> to vector<1x12xf32>
    %135 = vector.extract_strided_slice %128 {offsets = [6, 0], sizes = [1, 12], strides = [1, 1]} : vector<8x24xf32> to vector<1x12xf32>
    %136 = vector.extract_strided_slice %128 {offsets = [7, 0], sizes = [1, 12], strides = [1, 1]} : vector<8x24xf32> to vector<1x12xf32>
    %137 = vector.extract_strided_slice %128 {offsets = [0, 12], sizes = [1, 12], strides = [1, 1]} : vector<8x24xf32> to vector<1x12xf32>
    %138 = vector.extract_strided_slice %128 {offsets = [1, 12], sizes = [1, 12], strides = [1, 1]} : vector<8x24xf32> to vector<1x12xf32>
    %139 = vector.extract_strided_slice %128 {offsets = [2, 12], sizes = [1, 12], strides = [1, 1]} : vector<8x24xf32> to vector<1x12xf32>
    %140 = vector.extract_strided_slice %128 {offsets = [3, 12], sizes = [1, 12], strides = [1, 1]} : vector<8x24xf32> to vector<1x12xf32>
    %141 = vector.extract_strided_slice %128 {offsets = [4, 12], sizes = [1, 12], strides = [1, 1]} : vector<8x24xf32> to vector<1x12xf32>
    %142 = vector.extract_strided_slice %128 {offsets = [5, 12], sizes = [1, 12], strides = [1, 1]} : vector<8x24xf32> to vector<1x12xf32>
    %143 = vector.extract_strided_slice %128 {offsets = [6, 12], sizes = [1, 12], strides = [1, 1]} : vector<8x24xf32> to vector<1x12xf32>
    %144 = vector.extract_strided_slice %128 {offsets = [7, 12], sizes = [1, 12], strides = [1, 1]} : vector<8x24xf32> to vector<1x12xf32>
    %145 = tpu.concatenate %129, %130, %131, %132 in 1 : vector<1x12xf32>, vector<1x12xf32>, vector<1x12xf32>, vector<1x12xf32> -> vector<1x48xf32>
    %146 = tpu.concatenate %133, %134, %135, %136 in 1 : vector<1x12xf32>, vector<1x12xf32>, vector<1x12xf32>, vector<1x12xf32> -> vector<1x48xf32>
    %147 = tpu.concatenate %137, %138, %139, %140 in 1 : vector<1x12xf32>, vector<1x12xf32>, vector<1x12xf32>, vector<1x12xf32> -> vector<1x48xf32>
    %148 = tpu.concatenate %141, %142, %143, %144 in 1 : vector<1x12xf32>, vector<1x12xf32>, vector<1x12xf32>, vector<1x12xf32> -> vector<1x48xf32>
    %149 = tpu.concatenate %145, %146, %147, %148 in 0 : vector<1x48xf32>, vector<1x48xf32>, vector<1x48xf32>, vector<1x48xf32> -> vector<4x48xf32>
    %c0_26 = arith.constant 0 : index
    %c0_27 = arith.constant 0 : index
    %150 = vector.load %arg7[%c0_26, %c0_27] : memref<48x48xf32, #tpu.memory_space<vmem>>, vector<48x48xf32>
    %cst_28 = arith.constant dense<0.000000e+00> : vector<4x48xf32>
    %151 = tpu.matmul %149, %150, %cst_28 {dimension_numbers = #tpu.dot_dimension_numbers<[1], [0], [0], [1], [0, 0, 1, 1], [], []>} : vector<4x48xf32>, vector<48x48xf32>, vector<4x48xf32> -> vector<4x48xf32>
    %cst_29 = arith.constant 0.000000e+00 : f32
    %152 = vector.broadcast %cst_29 : f32 to vector<4x48xf32>
    %153 = arith.cmpf ogt, %151, %152 : vector<4x48xf32>
    %cst_30 = arith.constant 2.000000e-01 : f32
    %154 = vector.broadcast %cst_30 : f32 to vector<4x48xf32>
    %155 = arith.mulf %154, %151 : vector<4x48xf32>
    %156 = arith.select %153, %151, %155 : vector<4x48xi1>, vector<4x48xf32>
    %157 = vector.extract_strided_slice %156 {offsets = [0, 0], sizes = [1, 12], strides = [1, 1]} : vector<4x48xf32> to vector<1x12xf32>
    %158 = vector.extract_strided_slice %156 {offsets = [2, 0], sizes = [1, 12], strides = [1, 1]} : vector<4x48xf32> to vector<1x12xf32>
    %159 = tpu.concatenate %157, %158 in 1 : vector<1x12xf32>, vector<1x12xf32> -> vector<1x24xf32>
    %160 = vector.extract_strided_slice %156 {offsets = [0, 12], sizes = [1, 12], strides = [1, 1]} : vector<4x48xf32> to vector<1x12xf32>
    %161 = vector.extract_strided_slice %156 {offsets = [2, 12], sizes = [1, 12], strides = [1, 1]} : vector<4x48xf32> to vector<1x12xf32>
    %162 = tpu.concatenate %160, %161 in 1 : vector<1x12xf32>, vector<1x12xf32> -> vector<1x24xf32>
    %163 = vector.extract_strided_slice %156 {offsets = [0, 24], sizes = [1, 12], strides = [1, 1]} : vector<4x48xf32> to vector<1x12xf32>
    %164 = vector.extract_strided_slice %156 {offsets = [2, 24], sizes = [1, 12], strides = [1, 1]} : vector<4x48xf32> to vector<1x12xf32>
    %165 = tpu.concatenate %163, %164 in 1 : vector<1x12xf32>, vector<1x12xf32> -> vector<1x24xf32>
    %166 = vector.extract_strided_slice %156 {offsets = [0, 36], sizes = [1, 12], strides = [1, 1]} : vector<4x48xf32> to vector<1x12xf32>
    %167 = vector.extract_strided_slice %156 {offsets = [2, 36], sizes = [1, 12], strides = [1, 1]} : vector<4x48xf32> to vector<1x12xf32>
    %168 = tpu.concatenate %166, %167 in 1 : vector<1x12xf32>, vector<1x12xf32> -> vector<1x24xf32>
    %169 = vector.extract_strided_slice %156 {offsets = [1, 0], sizes = [1, 12], strides = [1, 1]} : vector<4x48xf32> to vector<1x12xf32>
    %170 = vector.extract_strided_slice %156 {offsets = [3, 0], sizes = [1, 12], strides = [1, 1]} : vector<4x48xf32> to vector<1x12xf32>
    %171 = tpu.concatenate %169, %170 in 1 : vector<1x12xf32>, vector<1x12xf32> -> vector<1x24xf32>
    %172 = vector.extract_strided_slice %156 {offsets = [1, 12], sizes = [1, 12], strides = [1, 1]} : vector<4x48xf32> to vector<1x12xf32>
    %173 = vector.extract_strided_slice %156 {offsets = [3, 12], sizes = [1, 12], strides = [1, 1]} : vector<4x48xf32> to vector<1x12xf32>
    %174 = tpu.concatenate %172, %173 in 1 : vector<1x12xf32>, vector<1x12xf32> -> vector<1x24xf32>
    %175 = vector.extract_strided_slice %156 {offsets = [1, 24], sizes = [1, 12], strides = [1, 1]} : vector<4x48xf32> to vector<1x12xf32>
    %176 = vector.extract_strided_slice %156 {offsets = [3, 24], sizes = [1, 12], strides = [1, 1]} : vector<4x48xf32> to vector<1x12xf32>
    %177 = tpu.concatenate %175, %176 in 1 : vector<1x12xf32>, vector<1x12xf32> -> vector<1x24xf32>
    %178 = vector.extract_strided_slice %156 {offsets = [1, 36], sizes = [1, 12], strides = [1, 1]} : vector<4x48xf32> to vector<1x12xf32>
    %179 = vector.extract_strided_slice %156 {offsets = [3, 36], sizes = [1, 12], strides = [1, 1]} : vector<4x48xf32> to vector<1x12xf32>
    %180 = tpu.concatenate %178, %179 in 1 : vector<1x12xf32>, vector<1x12xf32> -> vector<1x24xf32>
    %181 = tpu.concatenate %159, %162, %165, %168, %171, %174, %177, %180 in 0 : vector<1x24xf32>, vector<1x24xf32>, vector<1x24xf32>, vector<1x24xf32>, vector<1x24xf32>, vector<1x24xf32>, vector<1x24xf32>, vector<1x24xf32> -> vector<8x24xf32>
    %c0_31 = arith.constant 0 : index
    %c0_32 = arith.constant 0 : index
    %182 = vector.load %arg8[%c0_31, %c0_32] : memref<12x192xf32, #tpu.memory_space<vmem>>, vector<12x192xf32>
    %c0_33 = arith.constant 0 : index
    %c0_34 = arith.constant 0 : index
    %183 = vector.load %arg9[%c0_33, %c0_34] : memref<12x1xf32, #tpu.memory_space<vmem>>, vector<12x1xf32>
    %184 = vector.extract_strided_slice %181 {offsets = [0, 0], sizes = [8, 12], strides = [1, 1]} : vector<8x24xf32> to vector<8x12xf32>
    %cst_35 = arith.constant 0.000000e+00 : f32
    %185 = vector.broadcast %cst_35 : f32 to vector<8x11xf32>
    %cst_36 = arith.constant 0.000000e+00 : f32
    %186 = vector.broadcast %cst_36 : f32 to vector<8x12xf32>
    %187 = tpu.concatenate %185, %184, %186 in 1 : vector<8x11xf32>, vector<8x12xf32>, vector<8x12xf32> -> vector<8x35xf32>
    %188 = vector.extract_strided_slice %187 {offsets = [0, 0], sizes = [8, 12], strides = [1, 1]} : vector<8x35xf32> to vector<8x12xf32>
    %189 = vector.extract_strided_slice %187 {offsets = [0, 1], sizes = [8, 12], strides = [1, 1]} : vector<8x35xf32> to vector<8x12xf32>
    %190 = vector.extract_strided_slice %187 {offsets = [0, 2], sizes = [8, 12], strides = [1, 1]} : vector<8x35xf32> to vector<8x12xf32>
    %191 = vector.extract_strided_slice %187 {offsets = [0, 3], sizes = [8, 12], strides = [1, 1]} : vector<8x35xf32> to vector<8x12xf32>
    %192 = vector.extract_strided_slice %187 {offsets = [0, 4], sizes = [8, 12], strides = [1, 1]} : vector<8x35xf32> to vector<8x12xf32>
    %193 = vector.extract_strided_slice %187 {offsets = [0, 5], sizes = [8, 12], strides = [1, 1]} : vector<8x35xf32> to vector<8x12xf32>
    %194 = vector.extract_strided_slice %187 {offsets = [0, 6], sizes = [8, 12], strides = [1, 1]} : vector<8x35xf32> to vector<8x12xf32>
    %195 = vector.extract_strided_slice %187 {offsets = [0, 7], sizes = [8, 12], strides = [1, 1]} : vector<8x35xf32> to vector<8x12xf32>
    %196 = vector.extract_strided_slice %187 {offsets = [0, 8], sizes = [8, 12], strides = [1, 1]} : vector<8x35xf32> to vector<8x12xf32>
    %197 = vector.extract_strided_slice %187 {offsets = [0, 9], sizes = [8, 12], strides = [1, 1]} : vector<8x35xf32> to vector<8x12xf32>
    %198 = vector.extract_strided_slice %187 {offsets = [0, 10], sizes = [8, 12], strides = [1, 1]} : vector<8x35xf32> to vector<8x12xf32>
    %199 = vector.extract_strided_slice %187 {offsets = [0, 11], sizes = [8, 12], strides = [1, 1]} : vector<8x35xf32> to vector<8x12xf32>
    %200 = vector.extract_strided_slice %187 {offsets = [0, 12], sizes = [8, 12], strides = [1, 1]} : vector<8x35xf32> to vector<8x12xf32>
    %201 = vector.extract_strided_slice %187 {offsets = [0, 13], sizes = [8, 12], strides = [1, 1]} : vector<8x35xf32> to vector<8x12xf32>
    %202 = vector.extract_strided_slice %187 {offsets = [0, 14], sizes = [8, 12], strides = [1, 1]} : vector<8x35xf32> to vector<8x12xf32>
    %203 = vector.extract_strided_slice %187 {offsets = [0, 15], sizes = [8, 12], strides = [1, 1]} : vector<8x35xf32> to vector<8x12xf32>
    %204 = vector.extract_strided_slice %187 {offsets = [0, 16], sizes = [8, 12], strides = [1, 1]} : vector<8x35xf32> to vector<8x12xf32>
    %205 = vector.extract_strided_slice %187 {offsets = [0, 17], sizes = [8, 12], strides = [1, 1]} : vector<8x35xf32> to vector<8x12xf32>
    %206 = vector.extract_strided_slice %187 {offsets = [0, 18], sizes = [8, 12], strides = [1, 1]} : vector<8x35xf32> to vector<8x12xf32>
    %207 = vector.extract_strided_slice %187 {offsets = [0, 19], sizes = [8, 12], strides = [1, 1]} : vector<8x35xf32> to vector<8x12xf32>
    %208 = vector.extract_strided_slice %187 {offsets = [0, 20], sizes = [8, 12], strides = [1, 1]} : vector<8x35xf32> to vector<8x12xf32>
    %209 = vector.extract_strided_slice %187 {offsets = [0, 21], sizes = [8, 12], strides = [1, 1]} : vector<8x35xf32> to vector<8x12xf32>
    %210 = vector.extract_strided_slice %187 {offsets = [0, 22], sizes = [8, 12], strides = [1, 1]} : vector<8x35xf32> to vector<8x12xf32>
    %211 = vector.extract_strided_slice %187 {offsets = [0, 23], sizes = [8, 12], strides = [1, 1]} : vector<8x35xf32> to vector<8x12xf32>
    %212 = tpu.concatenate %188, %189, %190, %191, %192, %193, %194, %195, %196, %197, %198, %199, %200, %201, %202, %203 in 0 : vector<8x12xf32>, vector<8x12xf32>, vector<8x12xf32>, vector<8x12xf32>, vector<8x12xf32>, vector<8x12xf32>, vector<8x12xf32>, vector<8x12xf32>, vector<8x12xf32>, vector<8x12xf32>, vector<8x12xf32>, vector<8x12xf32>, vector<8x12xf32>, vector<8x12xf32>, vector<8x12xf32>, vector<8x12xf32> -> vector<128x12xf32>
    %213 = tpu.concatenate %204, %205, %206, %207, %208, %209, %210, %211 in 0 : vector<8x12xf32>, vector<8x12xf32>, vector<8x12xf32>, vector<8x12xf32>, vector<8x12xf32>, vector<8x12xf32>, vector<8x12xf32>, vector<8x12xf32> -> vector<64x12xf32>
    %214 = tpu.concatenate %212, %213 in 0 : vector<128x12xf32>, vector<64x12xf32> -> vector<192x12xf32>
    %215 = vector.extract_strided_slice %181 {offsets = [0, 12], sizes = [8, 12], strides = [1, 1]} : vector<8x24xf32> to vector<8x12xf32>
    %cst_37 = arith.constant 0.000000e+00 : f32
    %216 = vector.broadcast %cst_37 : f32 to vector<8x11xf32>
    %cst_38 = arith.constant 0.000000e+00 : f32
    %217 = vector.broadcast %cst_38 : f32 to vector<8x12xf32>
    %218 = tpu.concatenate %216, %215, %217 in 1 : vector<8x11xf32>, vector<8x12xf32>, vector<8x12xf32> -> vector<8x35xf32>
    %219 = vector.extract_strided_slice %218 {offsets = [0, 0], sizes = [8, 12], strides = [1, 1]} : vector<8x35xf32> to vector<8x12xf32>
    %220 = vector.extract_strided_slice %218 {offsets = [0, 1], sizes = [8, 12], strides = [1, 1]} : vector<8x35xf32> to vector<8x12xf32>
    %221 = vector.extract_strided_slice %218 {offsets = [0, 2], sizes = [8, 12], strides = [1, 1]} : vector<8x35xf32> to vector<8x12xf32>
    %222 = vector.extract_strided_slice %218 {offsets = [0, 3], sizes = [8, 12], strides = [1, 1]} : vector<8x35xf32> to vector<8x12xf32>
    %223 = vector.extract_strided_slice %218 {offsets = [0, 4], sizes = [8, 12], strides = [1, 1]} : vector<8x35xf32> to vector<8x12xf32>
    %224 = vector.extract_strided_slice %218 {offsets = [0, 5], sizes = [8, 12], strides = [1, 1]} : vector<8x35xf32> to vector<8x12xf32>
    %225 = vector.extract_strided_slice %218 {offsets = [0, 6], sizes = [8, 12], strides = [1, 1]} : vector<8x35xf32> to vector<8x12xf32>
    %226 = vector.extract_strided_slice %218 {offsets = [0, 7], sizes = [8, 12], strides = [1, 1]} : vector<8x35xf32> to vector<8x12xf32>
    %227 = vector.extract_strided_slice %218 {offsets = [0, 8], sizes = [8, 12], strides = [1, 1]} : vector<8x35xf32> to vector<8x12xf32>
    %228 = vector.extract_strided_slice %218 {offsets = [0, 9], sizes = [8, 12], strides = [1, 1]} : vector<8x35xf32> to vector<8x12xf32>
    %229 = vector.extract_strided_slice %218 {offsets = [0, 10], sizes = [8, 12], strides = [1, 1]} : vector<8x35xf32> to vector<8x12xf32>
    %230 = vector.extract_strided_slice %218 {offsets = [0, 11], sizes = [8, 12], strides = [1, 1]} : vector<8x35xf32> to vector<8x12xf32>
    %231 = vector.extract_strided_slice %218 {offsets = [0, 12], sizes = [8, 12], strides = [1, 1]} : vector<8x35xf32> to vector<8x12xf32>
    %232 = vector.extract_strided_slice %218 {offsets = [0, 13], sizes = [8, 12], strides = [1, 1]} : vector<8x35xf32> to vector<8x12xf32>
    %233 = vector.extract_strided_slice %218 {offsets = [0, 14], sizes = [8, 12], strides = [1, 1]} : vector<8x35xf32> to vector<8x12xf32>
    %234 = vector.extract_strided_slice %218 {offsets = [0, 15], sizes = [8, 12], strides = [1, 1]} : vector<8x35xf32> to vector<8x12xf32>
    %235 = vector.extract_strided_slice %218 {offsets = [0, 16], sizes = [8, 12], strides = [1, 1]} : vector<8x35xf32> to vector<8x12xf32>
    %236 = vector.extract_strided_slice %218 {offsets = [0, 17], sizes = [8, 12], strides = [1, 1]} : vector<8x35xf32> to vector<8x12xf32>
    %237 = vector.extract_strided_slice %218 {offsets = [0, 18], sizes = [8, 12], strides = [1, 1]} : vector<8x35xf32> to vector<8x12xf32>
    %238 = vector.extract_strided_slice %218 {offsets = [0, 19], sizes = [8, 12], strides = [1, 1]} : vector<8x35xf32> to vector<8x12xf32>
    %239 = vector.extract_strided_slice %218 {offsets = [0, 20], sizes = [8, 12], strides = [1, 1]} : vector<8x35xf32> to vector<8x12xf32>
    %240 = vector.extract_strided_slice %218 {offsets = [0, 21], sizes = [8, 12], strides = [1, 1]} : vector<8x35xf32> to vector<8x12xf32>
    %241 = vector.extract_strided_slice %218 {offsets = [0, 22], sizes = [8, 12], strides = [1, 1]} : vector<8x35xf32> to vector<8x12xf32>
    %242 = vector.extract_strided_slice %218 {offsets = [0, 23], sizes = [8, 12], strides = [1, 1]} : vector<8x35xf32> to vector<8x12xf32>
    %243 = tpu.concatenate %219, %220, %221, %222, %223, %224, %225, %226, %227, %228, %229, %230, %231, %232, %233, %234 in 0 : vector<8x12xf32>, vector<8x12xf32>, vector<8x12xf32>, vector<8x12xf32>, vector<8x12xf32>, vector<8x12xf32>, vector<8x12xf32>, vector<8x12xf32>, vector<8x12xf32>, vector<8x12xf32>, vector<8x12xf32>, vector<8x12xf32>, vector<8x12xf32>, vector<8x12xf32>, vector<8x12xf32>, vector<8x12xf32> -> vector<128x12xf32>
    %244 = tpu.concatenate %235, %236, %237, %238, %239, %240, %241, %242 in 0 : vector<8x12xf32>, vector<8x12xf32>, vector<8x12xf32>, vector<8x12xf32>, vector<8x12xf32>, vector<8x12xf32>, vector<8x12xf32>, vector<8x12xf32> -> vector<64x12xf32>
    %245 = tpu.concatenate %243, %244 in 0 : vector<128x12xf32>, vector<64x12xf32> -> vector<192x12xf32>
    %246 = tpu.concatenate %214, %245 in 1 : vector<192x12xf32>, vector<192x12xf32> -> vector<192x24xf32>
    %cst_39 = arith.constant dense<0.000000e+00> : vector<12x24xf32>
    %247 = tpu.matmul %182, %246, %cst_39 {dimension_numbers = #tpu.dot_dimension_numbers<[1], [0], [0], [1], [0, 0, 1, 1], [], []>} : vector<12x192xf32>, vector<192x24xf32>, vector<12x24xf32> -> vector<12x24xf32>
    %248 = vector.broadcast %183 : vector<12x1xf32> to vector<12x24xf32>
    %249 = arith.addf %247, %248 : vector<12x24xf32>
    %cst_40 = arith.constant 0.000000e+00 : f32
    %250 = vector.broadcast %cst_40 : f32 to vector<12x24xf32>
    %251 = arith.cmpf ogt, %249, %250 : vector<12x24xf32>
    %cst_41 = arith.constant 2.000000e-01 : f32
    %252 = vector.broadcast %cst_41 : f32 to vector<12x24xf32>
    %253 = arith.mulf %252, %249 : vector<12x24xf32>
    %254 = arith.select %251, %249, %253 : vector<12x24xi1>, vector<12x24xf32>
    %c0_42 = arith.constant 0 : index
    %c0_43 = arith.constant 0 : index
    %255 = vector.load %arg10[%c0_42, %c0_43] : memref<16x240xf32, #tpu.memory_space<vmem>>, vector<16x240xf32>
    %c0_44 = arith.constant 0 : index
    %c0_45 = arith.constant 0 : index
    %256 = vector.load %arg11[%c0_44, %c0_45] : memref<16x1xf32, #tpu.memory_space<vmem>>, vector<16x1xf32>
    %257 = vector.extract_strided_slice %254 {offsets = [0, 0], sizes = [12, 12], strides = [1, 1]} : vector<12x24xf32> to vector<12x12xf32>
    %cst_46 = arith.constant 0.000000e+00 : f32
    %258 = vector.broadcast %cst_46 : f32 to vector<12x9xf32>
    %cst_47 = arith.constant 0.000000e+00 : f32
    %259 = vector.broadcast %cst_47 : f32 to vector<12x10xf32>
    %260 = tpu.concatenate %258, %257, %259 in 1 : vector<12x9xf32>, vector<12x12xf32>, vector<12x10xf32> -> vector<12x31xf32>
    %261 = vector.extract_strided_slice %260 {offsets = [0, 0], sizes = [12, 12], strides = [1, 1]} : vector<12x31xf32> to vector<12x12xf32>
    %262 = vector.extract_strided_slice %260 {offsets = [0, 1], sizes = [12, 12], strides = [1, 1]} : vector<12x31xf32> to vector<12x12xf32>
    %263 = vector.extract_strided_slice %260 {offsets = [0, 2], sizes = [12, 12], strides = [1, 1]} : vector<12x31xf32> to vector<12x12xf32>
    %264 = vector.extract_strided_slice %260 {offsets = [0, 3], sizes = [12, 12], strides = [1, 1]} : vector<12x31xf32> to vector<12x12xf32>
    %265 = vector.extract_strided_slice %260 {offsets = [0, 4], sizes = [12, 12], strides = [1, 1]} : vector<12x31xf32> to vector<12x12xf32>
    %266 = vector.extract_strided_slice %260 {offsets = [0, 5], sizes = [12, 12], strides = [1, 1]} : vector<12x31xf32> to vector<12x12xf32>
    %267 = vector.extract_strided_slice %260 {offsets = [0, 6], sizes = [12, 12], strides = [1, 1]} : vector<12x31xf32> to vector<12x12xf32>
    %268 = vector.extract_strided_slice %260 {offsets = [0, 7], sizes = [12, 12], strides = [1, 1]} : vector<12x31xf32> to vector<12x12xf32>
    %269 = vector.extract_strided_slice %260 {offsets = [0, 8], sizes = [12, 12], strides = [1, 1]} : vector<12x31xf32> to vector<12x12xf32>
    %270 = vector.extract_strided_slice %260 {offsets = [0, 9], sizes = [12, 12], strides = [1, 1]} : vector<12x31xf32> to vector<12x12xf32>
    %271 = vector.extract_strided_slice %260 {offsets = [0, 10], sizes = [12, 12], strides = [1, 1]} : vector<12x31xf32> to vector<12x12xf32>
    %272 = vector.extract_strided_slice %260 {offsets = [0, 11], sizes = [12, 12], strides = [1, 1]} : vector<12x31xf32> to vector<12x12xf32>
    %273 = vector.extract_strided_slice %260 {offsets = [0, 12], sizes = [12, 12], strides = [1, 1]} : vector<12x31xf32> to vector<12x12xf32>
    %274 = vector.extract_strided_slice %260 {offsets = [0, 13], sizes = [12, 12], strides = [1, 1]} : vector<12x31xf32> to vector<12x12xf32>
    %275 = vector.extract_strided_slice %260 {offsets = [0, 14], sizes = [12, 12], strides = [1, 1]} : vector<12x31xf32> to vector<12x12xf32>
    %276 = vector.extract_strided_slice %260 {offsets = [0, 15], sizes = [12, 12], strides = [1, 1]} : vector<12x31xf32> to vector<12x12xf32>
    %277 = vector.extract_strided_slice %260 {offsets = [0, 16], sizes = [12, 12], strides = [1, 1]} : vector<12x31xf32> to vector<12x12xf32>
    %278 = vector.extract_strided_slice %260 {offsets = [0, 17], sizes = [12, 12], strides = [1, 1]} : vector<12x31xf32> to vector<12x12xf32>
    %279 = vector.extract_strided_slice %260 {offsets = [0, 18], sizes = [12, 12], strides = [1, 1]} : vector<12x31xf32> to vector<12x12xf32>
    %280 = vector.extract_strided_slice %260 {offsets = [0, 19], sizes = [12, 12], strides = [1, 1]} : vector<12x31xf32> to vector<12x12xf32>
    %281 = tpu.concatenate %261, %262, %263, %264, %265, %266, %267, %268, %269, %270, %271, %272, %273, %274, %275, %276 in 0 : vector<12x12xf32>, vector<12x12xf32>, vector<12x12xf32>, vector<12x12xf32>, vector<12x12xf32>, vector<12x12xf32>, vector<12x12xf32>, vector<12x12xf32>, vector<12x12xf32>, vector<12x12xf32>, vector<12x12xf32>, vector<12x12xf32>, vector<12x12xf32>, vector<12x12xf32>, vector<12x12xf32>, vector<12x12xf32> -> vector<192x12xf32>
    %282 = tpu.concatenate %277, %278, %279, %280 in 0 : vector<12x12xf32>, vector<12x12xf32>, vector<12x12xf32>, vector<12x12xf32> -> vector<48x12xf32>
    %283 = tpu.concatenate %281, %282 in 0 : vector<192x12xf32>, vector<48x12xf32> -> vector<240x12xf32>
    %284 = vector.extract_strided_slice %254 {offsets = [0, 12], sizes = [12, 12], strides = [1, 1]} : vector<12x24xf32> to vector<12x12xf32>
    %cst_48 = arith.constant 0.000000e+00 : f32
    %285 = vector.broadcast %cst_48 : f32 to vector<12x9xf32>
    %cst_49 = arith.constant 0.000000e+00 : f32
    %286 = vector.broadcast %cst_49 : f32 to vector<12x10xf32>
    %287 = tpu.concatenate %285, %284, %286 in 1 : vector<12x9xf32>, vector<12x12xf32>, vector<12x10xf32> -> vector<12x31xf32>
    %288 = vector.extract_strided_slice %287 {offsets = [0, 0], sizes = [12, 12], strides = [1, 1]} : vector<12x31xf32> to vector<12x12xf32>
    %289 = vector.extract_strided_slice %287 {offsets = [0, 1], sizes = [12, 12], strides = [1, 1]} : vector<12x31xf32> to vector<12x12xf32>
    %290 = vector.extract_strided_slice %287 {offsets = [0, 2], sizes = [12, 12], strides = [1, 1]} : vector<12x31xf32> to vector<12x12xf32>
    %291 = vector.extract_strided_slice %287 {offsets = [0, 3], sizes = [12, 12], strides = [1, 1]} : vector<12x31xf32> to vector<12x12xf32>
    %292 = vector.extract_strided_slice %287 {offsets = [0, 4], sizes = [12, 12], strides = [1, 1]} : vector<12x31xf32> to vector<12x12xf32>
    %293 = vector.extract_strided_slice %287 {offsets = [0, 5], sizes = [12, 12], strides = [1, 1]} : vector<12x31xf32> to vector<12x12xf32>
    %294 = vector.extract_strided_slice %287 {offsets = [0, 6], sizes = [12, 12], strides = [1, 1]} : vector<12x31xf32> to vector<12x12xf32>
    %295 = vector.extract_strided_slice %287 {offsets = [0, 7], sizes = [12, 12], strides = [1, 1]} : vector<12x31xf32> to vector<12x12xf32>
    %296 = vector.extract_strided_slice %287 {offsets = [0, 8], sizes = [12, 12], strides = [1, 1]} : vector<12x31xf32> to vector<12x12xf32>
    %297 = vector.extract_strided_slice %287 {offsets = [0, 9], sizes = [12, 12], strides = [1, 1]} : vector<12x31xf32> to vector<12x12xf32>
    %298 = vector.extract_strided_slice %287 {offsets = [0, 10], sizes = [12, 12], strides = [1, 1]} : vector<12x31xf32> to vector<12x12xf32>
    %299 = vector.extract_strided_slice %287 {offsets = [0, 11], sizes = [12, 12], strides = [1, 1]} : vector<12x31xf32> to vector<12x12xf32>
    %300 = vector.extract_strided_slice %287 {offsets = [0, 12], sizes = [12, 12], strides = [1, 1]} : vector<12x31xf32> to vector<12x12xf32>
    %301 = vector.extract_strided_slice %287 {offsets = [0, 13], sizes = [12, 12], strides = [1, 1]} : vector<12x31xf32> to vector<12x12xf32>
    %302 = vector.extract_strided_slice %287 {offsets = [0, 14], sizes = [12, 12], strides = [1, 1]} : vector<12x31xf32> to vector<12x12xf32>
    %303 = vector.extract_strided_slice %287 {offsets = [0, 15], sizes = [12, 12], strides = [1, 1]} : vector<12x31xf32> to vector<12x12xf32>
    %304 = vector.extract_strided_slice %287 {offsets = [0, 16], sizes = [12, 12], strides = [1, 1]} : vector<12x31xf32> to vector<12x12xf32>
    %305 = vector.extract_strided_slice %287 {offsets = [0, 17], sizes = [12, 12], strides = [1, 1]} : vector<12x31xf32> to vector<12x12xf32>
    %306 = vector.extract_strided_slice %287 {offsets = [0, 18], sizes = [12, 12], strides = [1, 1]} : vector<12x31xf32> to vector<12x12xf32>
    %307 = vector.extract_strided_slice %287 {offsets = [0, 19], sizes = [12, 12], strides = [1, 1]} : vector<12x31xf32> to vector<12x12xf32>
    %308 = tpu.concatenate %288, %289, %290, %291, %292, %293, %294, %295, %296, %297, %298, %299, %300, %301, %302, %303 in 0 : vector<12x12xf32>, vector<12x12xf32>, vector<12x12xf32>, vector<12x12xf32>, vector<12x12xf32>, vector<12x12xf32>, vector<12x12xf32>, vector<12x12xf32>, vector<12x12xf32>, vector<12x12xf32>, vector<12x12xf32>, vector<12x12xf32>, vector<12x12xf32>, vector<12x12xf32>, vector<12x12xf32>, vector<12x12xf32> -> vector<192x12xf32>
    %309 = tpu.concatenate %304, %305, %306, %307 in 0 : vector<12x12xf32>, vector<12x12xf32>, vector<12x12xf32>, vector<12x12xf32> -> vector<48x12xf32>
    %310 = tpu.concatenate %308, %309 in 0 : vector<192x12xf32>, vector<48x12xf32> -> vector<240x12xf32>
    %311 = tpu.concatenate %283, %310 in 1 : vector<240x12xf32>, vector<240x12xf32> -> vector<240x24xf32>
    %cst_50 = arith.constant dense<0.000000e+00> : vector<16x24xf32>
    %312 = tpu.matmul %255, %311, %cst_50 {dimension_numbers = #tpu.dot_dimension_numbers<[1], [0], [0], [1], [0, 0, 1, 1], [], []>} : vector<16x240xf32>, vector<240x24xf32>, vector<16x24xf32> -> vector<16x24xf32>
    %313 = vector.broadcast %256 : vector<16x1xf32> to vector<16x24xf32>
    %314 = arith.addf %312, %313 : vector<16x24xf32>
    %cst_51 = arith.constant 0.000000e+00 : f32
    %315 = vector.broadcast %cst_51 : f32 to vector<16x24xf32>
    %316 = arith.cmpf ogt, %314, %315 : vector<16x24xf32>
    %cst_52 = arith.constant 2.000000e-01 : f32
    %317 = vector.broadcast %cst_52 : f32 to vector<16x24xf32>
    %318 = arith.mulf %317, %314 : vector<16x24xf32>
    %319 = arith.select %316, %314, %318 : vector<16x24xi1>, vector<16x24xf32>
    %c0_53 = arith.constant 0 : index
    %c0_54 = arith.constant 0 : index
    %320 = vector.load %arg12[%c0_53, %c0_54] : memref<16x128xf32, #tpu.memory_space<vmem>>, vector<16x128xf32>
    %c0_55 = arith.constant 0 : index
    %c0_56 = arith.constant 0 : index
    %321 = vector.load %arg13[%c0_55, %c0_56] : memref<16x1xf32, #tpu.memory_space<vmem>>, vector<16x1xf32>
    %322 = vector.extract_strided_slice %319 {offsets = [0, 0], sizes = [16, 12], strides = [1, 1]} : vector<16x24xf32> to vector<16x12xf32>
    %cst_57 = arith.constant 0.000000e+00 : f32
    %323 = vector.broadcast %cst_57 : f32 to vector<16x3xf32>
    %cst_58 = arith.constant 0.000000e+00 : f32
    %324 = vector.broadcast %cst_58 : f32 to vector<16x4xf32>
    %325 = tpu.concatenate %323, %322, %324 in 1 : vector<16x3xf32>, vector<16x12xf32>, vector<16x4xf32> -> vector<16x19xf32>
    %326 = vector.extract_strided_slice %325 {offsets = [0, 0], sizes = [16, 12], strides = [1, 1]} : vector<16x19xf32> to vector<16x12xf32>
    %327 = vector.extract_strided_slice %325 {offsets = [0, 1], sizes = [16, 12], strides = [1, 1]} : vector<16x19xf32> to vector<16x12xf32>
    %328 = vector.extract_strided_slice %325 {offsets = [0, 2], sizes = [16, 12], strides = [1, 1]} : vector<16x19xf32> to vector<16x12xf32>
    %329 = vector.extract_strided_slice %325 {offsets = [0, 3], sizes = [16, 12], strides = [1, 1]} : vector<16x19xf32> to vector<16x12xf32>
    %330 = vector.extract_strided_slice %325 {offsets = [0, 4], sizes = [16, 12], strides = [1, 1]} : vector<16x19xf32> to vector<16x12xf32>
    %331 = vector.extract_strided_slice %325 {offsets = [0, 5], sizes = [16, 12], strides = [1, 1]} : vector<16x19xf32> to vector<16x12xf32>
    %332 = vector.extract_strided_slice %325 {offsets = [0, 6], sizes = [16, 12], strides = [1, 1]} : vector<16x19xf32> to vector<16x12xf32>
    %333 = vector.extract_strided_slice %325 {offsets = [0, 7], sizes = [16, 12], strides = [1, 1]} : vector<16x19xf32> to vector<16x12xf32>
    %334 = tpu.concatenate %326, %327, %328, %329, %330, %331, %332, %333 in 0 : vector<16x12xf32>, vector<16x12xf32>, vector<16x12xf32>, vector<16x12xf32>, vector<16x12xf32>, vector<16x12xf32>, vector<16x12xf32>, vector<16x12xf32> -> vector<128x12xf32>
    %335 = vector.extract_strided_slice %319 {offsets = [0, 12], sizes = [16, 12], strides = [1, 1]} : vector<16x24xf32> to vector<16x12xf32>
    %cst_59 = arith.constant 0.000000e+00 : f32
    %336 = vector.broadcast %cst_59 : f32 to vector<16x3xf32>
    %cst_60 = arith.constant 0.000000e+00 : f32
    %337 = vector.broadcast %cst_60 : f32 to vector<16x4xf32>
    %338 = tpu.concatenate %336, %335, %337 in 1 : vector<16x3xf32>, vector<16x12xf32>, vector<16x4xf32> -> vector<16x19xf32>
    %339 = vector.extract_strided_slice %338 {offsets = [0, 0], sizes = [16, 12], strides = [1, 1]} : vector<16x19xf32> to vector<16x12xf32>
    %340 = vector.extract_strided_slice %338 {offsets = [0, 1], sizes = [16, 12], strides = [1, 1]} : vector<16x19xf32> to vector<16x12xf32>
    %341 = vector.extract_strided_slice %338 {offsets = [0, 2], sizes = [16, 12], strides = [1, 1]} : vector<16x19xf32> to vector<16x12xf32>
    %342 = vector.extract_strided_slice %338 {offsets = [0, 3], sizes = [16, 12], strides = [1, 1]} : vector<16x19xf32> to vector<16x12xf32>
    %343 = vector.extract_strided_slice %338 {offsets = [0, 4], sizes = [16, 12], strides = [1, 1]} : vector<16x19xf32> to vector<16x12xf32>
    %344 = vector.extract_strided_slice %338 {offsets = [0, 5], sizes = [16, 12], strides = [1, 1]} : vector<16x19xf32> to vector<16x12xf32>
    %345 = vector.extract_strided_slice %338 {offsets = [0, 6], sizes = [16, 12], strides = [1, 1]} : vector<16x19xf32> to vector<16x12xf32>
    %346 = vector.extract_strided_slice %338 {offsets = [0, 7], sizes = [16, 12], strides = [1, 1]} : vector<16x19xf32> to vector<16x12xf32>
    %347 = tpu.concatenate %339, %340, %341, %342, %343, %344, %345, %346 in 0 : vector<16x12xf32>, vector<16x12xf32>, vector<16x12xf32>, vector<16x12xf32>, vector<16x12xf32>, vector<16x12xf32>, vector<16x12xf32>, vector<16x12xf32> -> vector<128x12xf32>
    %348 = tpu.concatenate %334, %347 in 1 : vector<128x12xf32>, vector<128x12xf32> -> vector<128x24xf32>
    %cst_61 = arith.constant dense<0.000000e+00> : vector<16x24xf32>
    %349 = tpu.matmul %320, %348, %cst_61 {dimension_numbers = #tpu.dot_dimension_numbers<[1], [0], [0], [1], [0, 0, 1, 1], [], []>} : vector<16x128xf32>, vector<128x24xf32>, vector<16x24xf32> -> vector<16x24xf32>
    %350 = vector.broadcast %321 : vector<16x1xf32> to vector<16x24xf32>
    %351 = arith.addf %349, %350 : vector<16x24xf32>
    %352 = vector.extract_strided_slice %351 {offsets = [0, 0], sizes = [16, 4], strides = [1, 1]} : vector<16x24xf32> to vector<16x4xf32>
    %cst_62 = arith.constant dense<0xFF800000> : vector<16xf32>
    %353 = vector.multi_reduction <maximumf>, %352, %cst_62 [1] : vector<16x4xf32> to vector<16xf32>
    %354 = vector.shape_cast %353 : vector<16xf32> to vector<16x1xf32>
    %355 = vector.extract_strided_slice %351 {offsets = [0, 4], sizes = [16, 4], strides = [1, 1]} : vector<16x24xf32> to vector<16x4xf32>
    %cst_63 = arith.constant dense<0xFF800000> : vector<16xf32>
    %356 = vector.multi_reduction <maximumf>, %355, %cst_63 [1] : vector<16x4xf32> to vector<16xf32>
    %357 = vector.shape_cast %356 : vector<16xf32> to vector<16x1xf32>
    %358 = vector.extract_strided_slice %351 {offsets = [0, 8], sizes = [16, 4], strides = [1, 1]} : vector<16x24xf32> to vector<16x4xf32>
    %cst_64 = arith.constant dense<0xFF800000> : vector<16xf32>
    %359 = vector.multi_reduction <maximumf>, %358, %cst_64 [1] : vector<16x4xf32> to vector<16xf32>
    %360 = vector.shape_cast %359 : vector<16xf32> to vector<16x1xf32>
    %361 = vector.extract_strided_slice %351 {offsets = [0, 12], sizes = [16, 4], strides = [1, 1]} : vector<16x24xf32> to vector<16x4xf32>
    %cst_65 = arith.constant dense<0xFF800000> : vector<16xf32>
    %362 = vector.multi_reduction <maximumf>, %361, %cst_65 [1] : vector<16x4xf32> to vector<16xf32>
    %363 = vector.shape_cast %362 : vector<16xf32> to vector<16x1xf32>
    %364 = vector.extract_strided_slice %351 {offsets = [0, 16], sizes = [16, 4], strides = [1, 1]} : vector<16x24xf32> to vector<16x4xf32>
    %cst_66 = arith.constant dense<0xFF800000> : vector<16xf32>
    %365 = vector.multi_reduction <maximumf>, %364, %cst_66 [1] : vector<16x4xf32> to vector<16xf32>
    %366 = vector.shape_cast %365 : vector<16xf32> to vector<16x1xf32>
    %367 = vector.extract_strided_slice %351 {offsets = [0, 20], sizes = [16, 4], strides = [1, 1]} : vector<16x24xf32> to vector<16x4xf32>
    %cst_67 = arith.constant dense<0xFF800000> : vector<16xf32>
    %368 = vector.multi_reduction <maximumf>, %367, %cst_67 [1] : vector<16x4xf32> to vector<16xf32>
    %369 = vector.shape_cast %368 : vector<16xf32> to vector<16x1xf32>
    %370 = tpu.concatenate %354, %357, %360, %363, %366, %369 in 1 : vector<16x1xf32>, vector<16x1xf32>, vector<16x1xf32>, vector<16x1xf32>, vector<16x1xf32>, vector<16x1xf32> -> vector<16x6xf32>
    %371 = vector.extract_strided_slice %370 {offsets = [0, 0], sizes = [1, 3], strides = [1, 1]} : vector<16x6xf32> to vector<1x3xf32>
    %372 = vector.extract_strided_slice %370 {offsets = [1, 0], sizes = [1, 3], strides = [1, 1]} : vector<16x6xf32> to vector<1x3xf32>
    %373 = vector.extract_strided_slice %370 {offsets = [2, 0], sizes = [1, 3], strides = [1, 1]} : vector<16x6xf32> to vector<1x3xf32>
    %374 = vector.extract_strided_slice %370 {offsets = [3, 0], sizes = [1, 3], strides = [1, 1]} : vector<16x6xf32> to vector<1x3xf32>
    %375 = vector.extract_strided_slice %370 {offsets = [4, 0], sizes = [1, 3], strides = [1, 1]} : vector<16x6xf32> to vector<1x3xf32>
    %376 = vector.extract_strided_slice %370 {offsets = [5, 0], sizes = [1, 3], strides = [1, 1]} : vector<16x6xf32> to vector<1x3xf32>
    %377 = vector.extract_strided_slice %370 {offsets = [6, 0], sizes = [1, 3], strides = [1, 1]} : vector<16x6xf32> to vector<1x3xf32>
    %378 = vector.extract_strided_slice %370 {offsets = [7, 0], sizes = [1, 3], strides = [1, 1]} : vector<16x6xf32> to vector<1x3xf32>
    %379 = vector.extract_strided_slice %370 {offsets = [8, 0], sizes = [1, 3], strides = [1, 1]} : vector<16x6xf32> to vector<1x3xf32>
    %380 = vector.extract_strided_slice %370 {offsets = [9, 0], sizes = [1, 3], strides = [1, 1]} : vector<16x6xf32> to vector<1x3xf32>
    %381 = vector.extract_strided_slice %370 {offsets = [10, 0], sizes = [1, 3], strides = [1, 1]} : vector<16x6xf32> to vector<1x3xf32>
    %382 = vector.extract_strided_slice %370 {offsets = [11, 0], sizes = [1, 3], strides = [1, 1]} : vector<16x6xf32> to vector<1x3xf32>
    %383 = vector.extract_strided_slice %370 {offsets = [12, 0], sizes = [1, 3], strides = [1, 1]} : vector<16x6xf32> to vector<1x3xf32>
    %384 = vector.extract_strided_slice %370 {offsets = [13, 0], sizes = [1, 3], strides = [1, 1]} : vector<16x6xf32> to vector<1x3xf32>
    %385 = vector.extract_strided_slice %370 {offsets = [14, 0], sizes = [1, 3], strides = [1, 1]} : vector<16x6xf32> to vector<1x3xf32>
    %386 = vector.extract_strided_slice %370 {offsets = [15, 0], sizes = [1, 3], strides = [1, 1]} : vector<16x6xf32> to vector<1x3xf32>
    %387 = vector.extract_strided_slice %370 {offsets = [0, 3], sizes = [1, 3], strides = [1, 1]} : vector<16x6xf32> to vector<1x3xf32>
    %388 = vector.extract_strided_slice %370 {offsets = [1, 3], sizes = [1, 3], strides = [1, 1]} : vector<16x6xf32> to vector<1x3xf32>
    %389 = vector.extract_strided_slice %370 {offsets = [2, 3], sizes = [1, 3], strides = [1, 1]} : vector<16x6xf32> to vector<1x3xf32>
    %390 = vector.extract_strided_slice %370 {offsets = [3, 3], sizes = [1, 3], strides = [1, 1]} : vector<16x6xf32> to vector<1x3xf32>
    %391 = vector.extract_strided_slice %370 {offsets = [4, 3], sizes = [1, 3], strides = [1, 1]} : vector<16x6xf32> to vector<1x3xf32>
    %392 = vector.extract_strided_slice %370 {offsets = [5, 3], sizes = [1, 3], strides = [1, 1]} : vector<16x6xf32> to vector<1x3xf32>
    %393 = vector.extract_strided_slice %370 {offsets = [6, 3], sizes = [1, 3], strides = [1, 1]} : vector<16x6xf32> to vector<1x3xf32>
    %394 = vector.extract_strided_slice %370 {offsets = [7, 3], sizes = [1, 3], strides = [1, 1]} : vector<16x6xf32> to vector<1x3xf32>
    %395 = vector.extract_strided_slice %370 {offsets = [8, 3], sizes = [1, 3], strides = [1, 1]} : vector<16x6xf32> to vector<1x3xf32>
    %396 = vector.extract_strided_slice %370 {offsets = [9, 3], sizes = [1, 3], strides = [1, 1]} : vector<16x6xf32> to vector<1x3xf32>
    %397 = vector.extract_strided_slice %370 {offsets = [10, 3], sizes = [1, 3], strides = [1, 1]} : vector<16x6xf32> to vector<1x3xf32>
    %398 = vector.extract_strided_slice %370 {offsets = [11, 3], sizes = [1, 3], strides = [1, 1]} : vector<16x6xf32> to vector<1x3xf32>
    %399 = vector.extract_strided_slice %370 {offsets = [12, 3], sizes = [1, 3], strides = [1, 1]} : vector<16x6xf32> to vector<1x3xf32>
    %400 = vector.extract_strided_slice %370 {offsets = [13, 3], sizes = [1, 3], strides = [1, 1]} : vector<16x6xf32> to vector<1x3xf32>
    %401 = vector.extract_strided_slice %370 {offsets = [14, 3], sizes = [1, 3], strides = [1, 1]} : vector<16x6xf32> to vector<1x3xf32>
    %402 = vector.extract_strided_slice %370 {offsets = [15, 3], sizes = [1, 3], strides = [1, 1]} : vector<16x6xf32> to vector<1x3xf32>
    %403 = tpu.concatenate %371, %372, %373, %374, %375, %376, %377, %378, %379, %380, %381, %382, %383, %384, %385, %386 in 1 : vector<1x3xf32>, vector<1x3xf32>, vector<1x3xf32>, vector<1x3xf32>, vector<1x3xf32>, vector<1x3xf32>, vector<1x3xf32>, vector<1x3xf32>, vector<1x3xf32>, vector<1x3xf32>, vector<1x3xf32>, vector<1x3xf32>, vector<1x3xf32>, vector<1x3xf32>, vector<1x3xf32>, vector<1x3xf32> -> vector<1x48xf32>
    %404 = tpu.concatenate %387, %388, %389, %390, %391, %392, %393, %394, %395, %396, %397, %398, %399, %400, %401, %402 in 1 : vector<1x3xf32>, vector<1x3xf32>, vector<1x3xf32>, vector<1x3xf32>, vector<1x3xf32>, vector<1x3xf32>, vector<1x3xf32>, vector<1x3xf32>, vector<1x3xf32>, vector<1x3xf32>, vector<1x3xf32>, vector<1x3xf32>, vector<1x3xf32>, vector<1x3xf32>, vector<1x3xf32>, vector<1x3xf32> -> vector<1x48xf32>
    %405 = tpu.concatenate %403, %404 in 0 : vector<1x48xf32>, vector<1x48xf32> -> vector<2x48xf32>
    %cst_68 = arith.constant 0.000000e+00 : f32
    %406 = vector.broadcast %cst_68 : f32 to vector<2x48xf32>
    %407 = arith.cmpf ogt, %405, %406 : vector<2x48xf32>
    %cst_69 = arith.constant 2.000000e-01 : f32
    %408 = vector.broadcast %cst_69 : f32 to vector<2x48xf32>
    %409 = arith.mulf %408, %405 : vector<2x48xf32>
    %410 = arith.select %407, %405, %409 : vector<2x48xi1>, vector<2x48xf32>
    %c0_70 = arith.constant 0 : index
    %c0_71 = arith.constant 0 : index
    %411 = vector.load %arg14[%c0_70, %c0_71] : memref<48x48xf32, #tpu.memory_space<vmem>>, vector<48x48xf32>
    %cst_72 = arith.constant dense<0.000000e+00> : vector<2x48xf32>
    %412 = tpu.matmul %410, %411, %cst_72 {dimension_numbers = #tpu.dot_dimension_numbers<[1], [0], [0], [1], [0, 0, 1, 1], [], []>} : vector<2x48xf32>, vector<48x48xf32>, vector<2x48xf32> -> vector<2x48xf32>
    %c0_73 = arith.constant 0 : index
    %c0_74 = arith.constant 0 : index
    %413 = vector.load %arg15[%c0_73, %c0_74] : memref<2x48xf32, #tpu.memory_space<vmem>>, vector<2x48xf32>
    tpu.vector_store %arg15[%c0_73, %c0_74], %412 {strides = array<i32>} : memref<2x48xf32, #tpu.memory_space<vmem>>, vector<2x48xf32>,
    return
  }
}

</mosaic_0001>

<llo_original>
// kernel: generator_forward.1
$region0: #{generator_forward.1}
  #allocation0 [shape = 'u32[]', space=smem, size = 0x4, offset = 0x4, fixed_abs, tag = 'smem constant byte address 0x4 - core index']
  #allocation1 [shape = 'u32[144,128]{1,0:T(1,128)}', space=vmem, size = 0x12000, scoped, tag = 'internal scratch']
  %s0 = inlined_call_operand.vmem [shape: f32[2,16], index: 0, kind: input, shape index: {}]
  %s1 = inlined_call_operand.hbm [shape: f32[16,32], index: 1, kind: input, shape index: {}]
  %s2 = inlined_call_operand.vmem [shape: f32[32,48], index: 2, kind: input, shape index: {}]
  %s3 = inlined_call_operand.vmem [shape: f32[4,1], index: 3, kind: input, shape index: {}]
  %s4 = inlined_call_operand.vmem [shape: f32[4,1], index: 4, kind: input, shape index: {}]
  %s5 = inlined_call_operand.vmem [shape: f32[8,128], index: 5, kind: input, shape index: {}]
  %s6 = inlined_call_operand.vmem [shape: f32[8,1], index: 6, kind: input, shape index: {}]
  %s7 = inlined_call_operand.vmem [shape: f32[48,48], index: 7, kind: input, shape index: {}]
  %s8 = inlined_call_operand.hbm [shape: f32[12,192], index: 8, kind: input, shape index: {}]
  %s9 = inlined_call_operand.vmem [shape: f32[12,1], index: 9, kind: input, shape index: {}]
  %s10 = inlined_call_operand.hbm [shape: f32[16,240], index: 10, kind: input, shape index: {}]
  %s11 = inlined_call_operand.vmem [shape: f32[16,1], index: 11, kind: input, shape index: {}]
  %s12 = inlined_call_operand.hbm [shape: f32[16,128], index: 12, kind: input, shape index: {}]
  %s13 = inlined_call_operand.vmem [shape: f32[16,1], index: 13, kind: input, shape index: {}]
  %s14 = inlined_call_operand.hbm [shape: f32[48,48], index: 14, kind: input, shape index: {}]
  %s15 = inlined_call_operand.hbm [shape: f32[2,48], index: 15, kind: output, shape index: {}]
  %s16 = sld [smem:[#allocation0]]
  $region90: #{generator_forward.1} parent=0
    _
  %s18 = ssub.s32 1, %s16
  %s19 = scalar_select 0, %s18, %s16
  $region1: #{generator_forward.1} parent=0
    #allocation2 [shape = 'u8[8192]{0}', space=vmem, size = 0x2000, scoped, tag = 'input window, operand 1, single buffered']
    #allocation3 [shape = 's32[1]{0}', space=sflag, size = 0x4, scoped, tag = 'scoped memory for generator_forward.1']
    #allocation4 [shape = 's32[1]{0}', space=sflag, size = 0x4, scoped, tag = 'scoped memory for generator_forward.1']
    #allocation5 [shape = 'u8[16384]{0}', space=vmem, size = 0x4000, scoped, tag = 'input window, operand 8, single buffered']
    #allocation6 [shape = 's32[1]{0}', space=sflag, size = 0x4, scoped, tag = 'scoped memory for generator_forward.1']
    #allocation7 [shape = 'u8[16384]{0}', space=vmem, size = 0x4000, scoped, tag = 'input window, operand 10, single buffered']
    #allocation8 [shape = 'u8[8192]{0}', space=vmem, size = 0x2000, scoped, tag = 'input window, operand 12, single buffered']
    #allocation9 [shape = 's32[1]{0}', space=sflag, size = 0x4, scoped, tag = 'scoped memory for generator_forward.1']
    #allocation10 [shape = 'u8[24576]{0}', space=vmem, size = 0x6000, scoped, tag = 'input window, operand 14, single buffered']
    #allocation11 [shape = 'u8[1024]{0}', space=vmem, size = 0x400, scoped, tag = 'output window, operand 0, single buffered']
    %20 = vsyncpa [#allocation3], 0
    %21 = vsyncpa [#allocation6], 0
    %22 = vsyncpa [#allocation9], 0
    %23 = vsyncpa [#allocation4], 0
    // Predicated region
    $region2: #{generator_forward.1} parent=1 // pred_check
      _
    $region3: #{generator_forward.1} parent=1 // pred_check_branch
      %25 = sbr.rel (0) target = $region5
    $region4: #{generator_forward.1} parent=1 // pred_region
      _
    $region5: #{generator_forward.1} parent=1 // pred_fallthru
      _
    // Predicated region
    $region6: #{generator_forward.1} parent=1 // pred_check
      _
    $region7: #{generator_forward.1} parent=1 // pred_check_branch
      %27 = sbr.rel (0) target = $region9
    $region8: #{generator_forward.1} parent=1 // pred_region
      %s29 = ssub.s32 256, 256
      %30 = vsyncadd [#allocation3], %s29
      %s31 = sshll.u32 [#allocation2], 4
      %s32 = int_to_ptr.vmem [resolvable:$true] %s31
      %37 = dma.hbm_to_vmem [thread:$0]  %s1, 256, %s32, [#allocation3], 128, 128, 8
    $region9: #{generator_forward.1} parent=1 // pred_fallthru
      _
    // Predicated region
    $region10: #{generator_forward.1} parent=1 // pred_check
      _
    $region11: #{generator_forward.1} parent=1 // pred_check_branch
      %39 = sbr.rel (0) target = $region13
    $region12: #{generator_forward.1} parent=1 // pred_region
      _
    $region13: #{generator_forward.1} parent=1 // pred_fallthru
      _
    // Predicated region
    $region14: #{generator_forward.1} parent=1 // pred_check
      _
    $region15: #{generator_forward.1} parent=1 // pred_check_branch
      %41 = sbr.rel (0) target = $region17
    $region16: #{generator_forward.1} parent=1 // pred_region
      _
    $region17: #{generator_forward.1} parent=1 // pred_fallthru
      _
    // Predicated region
    $region18: #{generator_forward.1} parent=1 // pred_check
      _
    $region19: #{generator_forward.1} parent=1 // pred_check_branch
      %43 = sbr.rel (0) target = $region21
    $region20: #{generator_forward.1} parent=1 // pred_region
      _
    $region21: #{generator_forward.1} parent=1 // pred_fallthru
      _
    // Predicated region
    $region22: #{generator_forward.1} parent=1 // pred_check
      _
    $region23: #{generator_forward.1} parent=1 // pred_check_branch
      %45 = sbr.rel (0) target = $region25
    $region24: #{generator_forward.1} parent=1 // pred_region
      _
    $region25: #{generator_forward.1} parent=1 // pred_fallthru
      _
    // Predicated region
    $region26: #{generator_forward.1} parent=1 // pred_check
      _
    $region27: #{generator_forward.1} parent=1 // pred_check_branch
      %47 = sbr.rel (0) target = $region29
    $region28: #{generator_forward.1} parent=1 // pred_region
      _
    $region29: #{generator_forward.1} parent=1 // pred_fallthru
      _
    // Predicated region
    $region30: #{generator_forward.1} parent=1 // pred_check
      _
    $region31: #{generator_forward.1} parent=1 // pred_check_branch
      %49 = sbr.rel (0) target = $region33
    $region32: #{generator_forward.1} parent=1 // pred_region
      _
    $region33: #{generator_forward.1} parent=1 // pred_fallthru
      _
    // Predicated region
    $region34: #{generator_forward.1} parent=1 // pred_check
      _
    $region35: #{generator_forward.1} parent=1 // pred_check_branch
      %51 = sbr.rel (0) target = $region37
    $region36: #{generator_forward.1} parent=1 // pred_region
      %s53 = ssub.s32 512, 512
      %54 = vsyncadd [#allocation6], %s53
      %s55 = sshll.u32 [#allocation5], 4
      %s56 = int_to_ptr.vmem [resolvable:$true] %s55
      %61 = dma.hbm_to_vmem [thread:$0]  %s8, 512, %s56, [#allocation6], 256, 256, 16
    $region37: #{generator_forward.1} parent=1 // pred_fallthru
      _
    // Predicated region
    $region38: #{generator_forward.1} parent=1 // pred_check
      _
    $region39: #{generator_forward.1} parent=1 // pred_check_branch
      %63 = sbr.rel (0) target = $region41
    $region40: #{generator_forward.1} parent=1 // pred_region
      _
    $region41: #{generator_forward.1} parent=1 // pred_fallthru
      _
    // Predicated region
    $region42: #{generator_forward.1} parent=1 // pred_check
      _
    $region43: #{generator_forward.1} parent=1 // pred_check_branch
      %65 = sbr.rel (0) target = $region45
    $region44: #{generator_forward.1} parent=1 // pred_region
      %s67 = ssub.s32 512, 512
      %68 = vsyncadd [#allocation6], %s67
      %s69 = sshll.u32 [#allocation7], 4
      %s70 = int_to_ptr.vmem [resolvable:$true] %s69
      %75 = dma.hbm_to_vmem [thread:$0]  %s10, 512, %s70, [#allocation6], 256, 256, 16
    $region45: #{generator_forward.1} parent=1 // pred_fallthru
      _
    // Predicated region
    $region46: #{generator_forward.1} parent=1 // pred_check
      _
    $region47: #{generator_forward.1} parent=1 // pred_check_branch
      %77 = sbr.rel (0) target = $region49
    $region48: #{generator_forward.1} parent=1 // pred_region
      _
    $region49: #{generator_forward.1} parent=1 // pred_fallthru
      _
    // Predicated region
    $region50: #{generator_forward.1} parent=1 // pred_check
      _
    $region51: #{generator_forward.1} parent=1 // pred_check_branch
      %79 = sbr.rel (0) target = $region53
    $region52: #{generator_forward.1} parent=1 // pred_region
      %s81 = ssub.s32 256, 256
      %82 = vsyncadd [#allocation9], %s81
      %s83 = sshll.u32 [#allocation8], 4
      %s84 = int_to_ptr.vmem [resolvable:$true] %s83
      %89 = dma.hbm_to_vmem [thread:$0]  %s12, 256, %s84, [#allocation9], 128, 128, 8
    $region53: #{generator_forward.1} parent=1 // pred_fallthru
      _
    // Predicated region
    $region54: #{generator_forward.1} parent=1 // pred_check
      _
    $region55: #{generator_forward.1} parent=1 // pred_check_branch
      %91 = sbr.rel (0) target = $region57
    $region56: #{generator_forward.1} parent=1 // pred_region
      _
    $region57: #{generator_forward.1} parent=1 // pred_fallthru
      _
    // Predicated region
    $region58: #{generator_forward.1} parent=1 // pred_check
      _
    $region59: #{generator_forward.1} parent=1 // pred_check_branch
      %93 = sbr.rel (0) target = $region61
    $region60: #{generator_forward.1} parent=1 // pred_region
      %s95 = ssub.s32 768, 768
      %96 = vsyncadd [#allocation9], %s95
      %s97 = sshll.u32 [#allocation10], 4
      %s98 = int_to_ptr.vmem [resolvable:$true] %s97
      %103 = dma.hbm_to_vmem [thread:$0]  %s14, 768, %s98, [#allocation9], 128, 128, 8
    $region61: #{generator_forward.1} parent=1 // pred_fallthru
      _
    // Predicated region
    $region62: #{generator_forward.1} parent=1 // pred_check
      _
    $region63: #{generator_forward.1} parent=1 // pred_check_branch
      %105 = sbr.rel (0) target = $region65
    $region64: #{generator_forward.1} parent=1 // pred_region
      %106 = dma.done [#allocation3], 256
    $region65: #{generator_forward.1} parent=1 // pred_fallthru
      _
    // Predicated region
    $region66: #{generator_forward.1} parent=1 // pred_check
      _
    $region67: #{generator_forward.1} parent=1 // pred_check_branch
      %108 = sbr.rel (0) target = $region69
    $region68: #{generator_forward.1} parent=1 // pred_region
      %109 = dma.done [#allocation6], 512
    $region69: #{generator_forward.1} parent=1 // pred_fallthru
      _
    // Predicated region
    $region70: #{generator_forward.1} parent=1 // pred_check
      _
    $region71: #{generator_forward.1} parent=1 // pred_check_branch
      %111 = sbr.rel (0) target = $region73
    $region72: #{generator_forward.1} parent=1 // pred_region
      %112 = dma.done [#allocation6], 512
    $region73: #{generator_forward.1} parent=1 // pred_fallthru
      _
    // Predicated region
    $region74: #{generator_forward.1} parent=1 // pred_check
      _
    $region75: #{generator_forward.1} parent=1 // pred_check_branch
      %114 = sbr.rel (0) target = $region77
    $region76: #{generator_forward.1} parent=1 // pred_region
      %115 = dma.done [#allocation9], 256
    $region77: #{generator_forward.1} parent=1 // pred_fallthru
      _
    // Predicated region
    $region78: #{generator_forward.1} parent=1 // pred_check
      _
    $region79: #{generator_forward.1} parent=1 // pred_check_branch
      %117 = sbr.rel (0) target = $region81
    $region80: #{generator_forward.1} parent=1 // pred_region
      %118 = dma.done [#allocation9], 768
    $region81: #{generator_forward.1} parent=1 // pred_fallthru
      _
    %v119 = vld [vmem:[%s0] sm:$0x3]
    %v120 = vld [vmem:[#allocation2] sm:$0xff]
    %v121 = vld [vmem:[#allocation2 + $0x8] sm:$0xff]
    %vm122 = vcmask 130048
    %v124 = vsel %vm122, %v119, 0
    %126 = vmatprep.subr.mxu0 0.0
    %127 = vmatpush1.msra.mxu0 0.0
    %128 = vmatprep.subr.mxu0 0.0
    %129 = vmatpush1.msra.mxu0 0.0
    %130 = vmatprep.subr.mxu0 0.0
    %131 = vmatpush1.msra.mxu0 0.0
    %132 = vmatprep.subr.mxu0 0.0
    %133 = vmatpush1.msra.mxu0 0.0
    %134 = vmatprep.subr.mxu0 0.0
    %135 = vmatpush1.msra.mxu0 0.0
    %136 = vmatprep.subr.mxu0 0.0
    %137 = vmatpush1.msra.mxu0 0.0
    %138 = vmatprep.subr.mxu0 0.0
    %139 = vmatpush1.msra.mxu0 0.0
    %140 = vmatprep.subr.mxu0 0.0
    %141 = vmatpush1.msra.mxu0 0.0
    %142 = vmatprep.subr.mxu0 0.0
    %143 = vmatpush1.msra.mxu0 0.0
    %144 = vmatprep.subr.mxu0 0.0
    %145 = vmatpush1.msra.mxu0 0.0
    %146 = vmatprep.subr.mxu0 0.0
    %147 = vmatpush1.msra.mxu0 0.0
    %148 = vmatprep.subr.mxu0 0.0
    %149 = vmatpush1.msra.mxu0 0.0
    %150 = vmatprep.subr.mxu0 0.0
    %151 = vmatpush1.msra.mxu0 0.0
    %152 = vmatprep.subr.mxu0 0.0
    %153 = vmatpush1.msra.mxu0 0.0
    %154 = vmatprep.subr.mxu0 0.0
    %155 = vmatpush1.msra.mxu0 %v121
    %156 = vmatprep.subr.mxu0 0.0
    %157 = vmatpush1.msra.mxu0 %v120
    %158 = vmatprep.subr.mxu0 0.0
    %159 = vmatpush2.msra.mxu0 0.0
    %160 = vmatprep.subr.mxu0 0.0
    %161 = vmatpush2.msra.mxu0 0.0
    %162 = vmatprep.subr.mxu0 0.0
    %163 = vmatpush2.msra.mxu0 0.0
    %164 = vmatprep.subr.mxu0 0.0
    %165 = vmatpush2.msra.mxu0 0.0
    %166 = vmatprep.subr.mxu0 0.0
    %167 = vmatpush2.msra.mxu0 0.0
    %168 = vmatprep.subr.mxu0 0.0
    %169 = vmatpush2.msra.mxu0 0.0
    %170 = vmatprep.subr.mxu0 0.0
    %171 = vmatpush2.msra.mxu0 0.0
    %172 = vmatprep.subr.mxu0 0.0
    %173 = vmatpush2.msra.mxu0 0.0
    %174 = vmatprep.subr.mxu0 0.0
    %175 = vmatpush2.msra.mxu0 0.0
    %176 = vmatprep.subr.mxu0 0.0
    %177 = vmatpush2.msra.mxu0 0.0
    %178 = vmatprep.subr.mxu0 0.0
    %179 = vmatpush2.msra.mxu0 0.0
    %180 = vmatprep.subr.mxu0 0.0
    %181 = vmatpush2.msra.mxu0 0.0
    %182 = vmatprep.subr.mxu0 0.0
    %183 = vmatpush2.msra.mxu0 0.0
    %184 = vmatprep.subr.mxu0 0.0
    %185 = vmatpush2.msra.mxu0 0.0
    %186 = vmatprep.subr.mxu0 0.0
    %187 = vmatpush2.msra.mxu0 0.0
    %188 = vmatprep.subr.mxu0 0.0
    %189 = vmatpush2.msra.mxu0 0.0
    %190 = vmatprep.mubr.f32.mxu0 0.0
    %191 = vmatmul.mubr.f32.gmra.mxu0 %v124
    %v192 = vpop.f32.mrf.mxu0
    %v193 = vadd.f32 0.0, %v192
    %v194 = vpop.f32.mrf.mxu0
    %195 = vdwg.mxu0
    %vm196 = vcmp.gt.f32.partialorder %v193, 0.0
    %v197 = vmul.f32 %v193, 0.2
    %v198 = vsel %vm196, %v193, %v197
    %v199 = vld [vmem:[%s2] sm:$0xff]
    %v200 = vld [vmem:[%s2 + $0x8] sm:$0xff]
    %v201 = vld [vmem:[%s2 + $0x10] sm:$0xff]
    %v202 = vld [vmem:[%s2 + $0x18] sm:$0xff]
    %vm203 = vcmask 261120
    %v205 = vsel %vm203, %v198, 0
    %207 = vmatprep.subr.mxu0 0.0
    %208 = vmatpush1.msra.mxu0 0.0
    %209 = vmatprep.subr.mxu0 0.0
    %210 = vmatpush1.msra.mxu0 0.0
    %211 = vmatprep.subr.mxu0 0.0
    %212 = vmatpush1.msra.mxu0 0.0
    %213 = vmatprep.subr.mxu0 0.0
    %214 = vmatpush1.msra.mxu0 0.0
    %215 = vmatprep.subr.mxu0 0.0
    %216 = vmatpush1.msra.mxu0 0.0
    %217 = vmatprep.subr.mxu0 0.0
    %218 = vmatpush1.msra.mxu0 0.0
    %219 = vmatprep.subr.mxu0 0.0
    %220 = vmatpush1.msra.mxu0 0.0
    %221 = vmatprep.subr.mxu0 0.0
    %222 = vmatpush1.msra.mxu0 0.0
    %223 = vmatprep.subr.mxu0 0.0
    %224 = vmatpush1.msra.mxu0 0.0
    %225 = vmatprep.subr.mxu0 0.0
    %226 = vmatpush1.msra.mxu0 0.0
    %227 = vmatprep.subr.mxu0 0.0
    %228 = vmatpush1.msra.mxu0 0.0
    %229 = vmatprep.subr.mxu0 0.0
    %230 = vmatpush1.msra.mxu0 0.0
    %231 = vmatprep.subr.mxu0 0.0
    %232 = vmatpush1.msra.mxu0 %v202
    %233 = vmatprep.subr.mxu0 0.0
    %234 = vmatpush1.msra.mxu0 %v201
    %235 = vmatprep.subr.mxu0 0.0
    %236 = vmatpush1.msra.mxu0 %v200
    %237 = vmatprep.subr.mxu0 0.0
    %238 = vmatpush1.msra.mxu0 %v199
    %239 = vmatprep.subr.mxu0 0.0
    %240 = vmatpush2.msra.mxu0 0.0
    %241 = vmatprep.subr.mxu0 0.0
    %242 = vmatpush2.msra.mxu0 0.0
    %243 = vmatprep.subr.mxu0 0.0
    %244 = vmatpush2.msra.mxu0 0.0
    %245 = vmatprep.subr.mxu0 0.0
    %246 = vmatpush2.msra.mxu0 0.0
    %247 = vmatprep.subr.mxu0 0.0
    %248 = vmatpush2.msra.mxu0 0.0
    %249 = vmatprep.subr.mxu0 0.0
    %250 = vmatpush2.msra.mxu0 0.0
    %251 = vmatprep.subr.mxu0 0.0
    %252 = vmatpush2.msra.mxu0 0.0
    %253 = vmatprep.subr.mxu0 0.0
    %254 = vmatpush2.msra.mxu0 0.0
    %255 = vmatprep.subr.mxu0 0.0
    %256 = vmatpush2.msra.mxu0 0.0
    %257 = vmatprep.subr.mxu0 0.0
    %258 = vmatpush2.msra.mxu0 0.0
    %259 = vmatprep.subr.mxu0 0.0
    %260 = vmatpush2.msra.mxu0 0.0
    %261 = vmatprep.subr.mxu0 0.0
    %262 = vmatpush2.msra.mxu0 0.0
    %263 = vmatprep.subr.mxu0 0.0
    %264 = vmatpush2.msra.mxu0 0.0
    %265 = vmatprep.subr.mxu0 0.0
    %266 = vmatpush2.msra.mxu0 0.0
    %267 = vmatprep.subr.mxu0 0.0
    %268 = vmatpush2.msra.mxu0 0.0
    %269 = vmatprep.subr.mxu0 0.0
    %270 = vmatpush2.msra.mxu0 0.0
    %271 = vmatprep.mubr.f32.mxu0 0.0
    %272 = vmatmul.mubr.f32.gmra.mxu0 %v205
    %v273 = vpop.f32.mrf.mxu0
    %v274 = vadd.f32 0.0, %v273
    %v275 = vpop.f32.mrf.mxu0
    %276 = vdwg.mxu0
    %v278 = vrot.slane %v274, 1
    %279 = vrot.lane.b32.xlu0 %v278, 12
    %v280 = vpop.permute.xlu0 %279
    %vm282 = vcmask 97280
    %v283 = vsel %vm282, %v274, %v280
    %284 = vrot.lane.b32.xlu0 %v274, 116
    %v285 = vpop.permute.xlu0 %284
    %v288 = vsel %vm282, %v285, %v278
    %289 = vrot.lane.b32.xlu0 %v274, 104
    %v290 = vpop.permute.xlu0 %289
    %292 = vrot.lane.b32.xlu0 %v278, 116
    %v293 = vpop.permute.xlu0 %292
    %v295 = vsel %vm282, %v290, %v293
    %296 = vrot.lane.b32.xlu0 %v274, 92
    %v297 = vpop.permute.xlu0 %296
    %299 = vrot.lane.b32.xlu0 %v278, 104
    %v300 = vpop.permute.xlu0 %299
    %v302 = vsel %vm282, %v297, %v300
    %v304 = vrot.slane %v288, 7
    %v307 = vrot.slane %v295, 6
    %v310 = vrot.slane %v302, 5
    %vm312 = vcmask 1040384
    %v313 = vsel %vm312, %v283, %v304
    %vm314 = vcmask 1041408
    %v315 = vsel %vm314, %v313, %v307
    %vm316 = vcmask 1042432
    %v317 = vsel %vm316, %v315, %v310
    %vm318 = vcmask 191488
    %v319 = vsel %vm318, %v317, 0.0
    %320 = vadd.xlane.f32.xlu0 %v319
    %v321 = vpop.xlane.xlu0 %320
    %v322 = vrcp.pop 24.0
    %v323 = vmul.f32 %v321, %v322
    %v324 = vsub.f32 %v317, %v323
    %v325 = vmul.f32 %v324, %v324
    %v326 = vsel %vm318, %v325, 0.0
    %327 = vadd.xlane.f32.xlu0 %v326
    %v328 = vpop.xlane.xlu0 %327
    %v329 = vmul.f32 %v328, %v322
    %v330 = vadd.f32 %v329, 1e-05
    %v331 = vrsqrt.pop %v330
    %v332 = vmul.f32 %v324, %v331
    %v333 = vld [vmem:[%s3] sm:$0xf]
    %335 = vset.pattern.permute.xlu0 0
    %336 = vperm.xlu0 %335, %v333
    %v337 = vpop.permute.xlu0 %336
    %v339 = vmul.f32 %v332, %v337
    %v340 = vld [vmem:[%s4] sm:$0xf]
    %342 = vset.pattern.permute.xlu0 0
    %343 = vperm.xlu0 %342, %v340
    %v344 = vpop.permute.xlu0 %343
    %v346 = vadd.f32 %v339, %v344
    %v347 = vld [vmem:[%s5] sm:$0xff]
    %v348 = vld [vmem:[%s6] sm:$0xff]
    %350 = vrot.lane.b32.xlu0 %v346, 15
    %v351 = vpop.permute.xlu0 %350
    %vm353 = vcmask 121856
    %v354 = vsel %vm353, 0.0, %v351
    %vm355 = vcmask 220160
    %v356 = vsel %vm355, %v354, 0.0
    %v358 = vrot.slane %v356, 4
    %359 = vrot.lane.b32.xlu0 %v358, 127
    %v360 = vpop.permute.xlu0 %359
    %362 = vrot.lane.b32.xlu0 %v356, 126
    %v363 = vpop.permute.xlu0 %362
    %365 = vrot.lane.b32.xlu0 %v358, 125
    %v366 = vpop.permute.xlu0 %365
    %368 = vrot.lane.b32.xlu0 %v356, 124
    %v369 = vpop.permute.xlu0 %368
    %371 = vrot.lane.b32.xlu0 %v358, 123
    %v372 = vpop.permute.xlu0 %371
    %374 = vrot.lane.b32.xlu0 %v356, 122
    %v375 = vpop.permute.xlu0 %374
    %377 = vrot.lane.b32.xlu0 %v358, 121
    %v378 = vpop.permute.xlu0 %377
    %380 = vrot.lane.b32.xlu0 %v356, 120
    %v381 = vpop.permute.xlu0 %380
    %383 = vrot.lane.b32.xlu0 %v358, 119
    %v384 = vpop.permute.xlu0 %383
    %386 = vrot.lane.b32.xlu0 %v356, 118
    %v387 = vpop.permute.xlu0 %386
    %389 = vrot.lane.b32.xlu0 %v358, 117
    %v390 = vpop.permute.xlu0 %389
    %392 = vrot.lane.b32.xlu0 %v356, 116
    %v393 = vpop.permute.xlu0 %392
    %395 = vrot.lane.b32.xlu0 %v358, 115
    %v396 = vpop.permute.xlu0 %395
    %398 = vrot.lane.b32.xlu0 %v356, 114
    %v399 = vpop.permute.xlu0 %398
    %401 = vrot.lane.b32.xlu0 %v358, 113
    %v402 = vpop.permute.xlu0 %401
    %vm404 = vcmask 1043456
    %v405 = vsel %vm404, %v356, %v360
    %v406 = vsel %vm404, %v363, %v366
    %v407 = vsel %vm404, %v369, %v372
    %v408 = vsel %vm404, %v375, %v378
    %v409 = vsel %vm404, %v381, %v384
    %v410 = vsel %vm404, %v387, %v390
    %v411 = vsel %vm404, %v393, %v396
    %v412 = vsel %vm404, %v399, %v402
    %421 = vrot.lane.b32.xlu0 %v405, 112
    %v422 = vpop.permute.xlu0 %421
    %423 = vrot.lane.b32.xlu0 %v406, 112
    %v424 = vpop.permute.xlu0 %423
    %425 = vrot.lane.b32.xlu0 %v407, 112
    %v426 = vpop.permute.xlu0 %425
    %427 = vrot.lane.b32.xlu0 %v408, 112
    %v428 = vpop.permute.xlu0 %427
    %429 = vrot.lane.b32.xlu0 %v409, 112
    %v430 = vpop.permute.xlu0 %429
    %431 = vrot.lane.b32.xlu0 %v410, 112
    %v432 = vpop.permute.xlu0 %431
    %433 = vrot.lane.b32.xlu0 %v411, 112
    %v434 = vpop.permute.xlu0 %433
    %435 = vrot.lane.b32.xlu0 %v412, 112
    %v436 = vpop.permute.xlu0 %435
    %445 = vrot.lane.b32.xlu0 %v346, 3
    %v446 = vpop.permute.xlu0 %445
    %v448 = vsel %vm353, 0.0, %v446
    %v449 = vsel %vm355, %v448, 0.0
    %v451 = vrot.slane %v449, 4
    %452 = vrot.lane.b32.xlu0 %v451, 127
    %v453 = vpop.permute.xlu0 %452
    %455 = vrot.lane.b32.xlu0 %v449, 126
    %v456 = vpop.permute.xlu0 %455
    %458 = vrot.lane.b32.xlu0 %v451, 125
    %v459 = vpop.permute.xlu0 %458
    %461 = vrot.lane.b32.xlu0 %v449, 124
    %v462 = vpop.permute.xlu0 %461
    %464 = vrot.lane.b32.xlu0 %v451, 123
    %v465 = vpop.permute.xlu0 %464
    %467 = vrot.lane.b32.xlu0 %v449, 122
    %v468 = vpop.permute.xlu0 %467
    %470 = vrot.lane.b32.xlu0 %v451, 121
    %v471 = vpop.permute.xlu0 %470
    %473 = vrot.lane.b32.xlu0 %v449, 120
    %v474 = vpop.permute.xlu0 %473
    %476 = vrot.lane.b32.xlu0 %v451, 119
    %v477 = vpop.permute.xlu0 %476
    %479 = vrot.lane.b32.xlu0 %v449, 118
    %v480 = vpop.permute.xlu0 %479
    %482 = vrot.lane.b32.xlu0 %v451, 117
    %v483 = vpop.permute.xlu0 %482
    %485 = vrot.lane.b32.xlu0 %v449, 116
    %v486 = vpop.permute.xlu0 %485
    %488 = vrot.lane.b32.xlu0 %v451, 115
    %v489 = vpop.permute.xlu0 %488
    %491 = vrot.lane.b32.xlu0 %v449, 114
    %v492 = vpop.permute.xlu0 %491
    %494 = vrot.lane.b32.xlu0 %v451, 113
    %v495 = vpop.permute.xlu0 %494
    %v497 = vsel %vm404, %v449, %v453
    %v498 = vsel %vm404, %v456, %v459
    %v499 = vsel %vm404, %v462, %v465
    %v500 = vsel %vm404, %v468, %v471
    %v501 = vsel %vm404, %v474, %v477
    %v502 = vsel %vm404, %v480, %v483
    %v503 = vsel %vm404, %v486, %v489
    %v504 = vsel %vm404, %v492, %v495
    %513 = vrot.lane.b32.xlu0 %v497, 112
    %v514 = vpop.permute.xlu0 %513
    %515 = vrot.lane.b32.xlu0 %v498, 112
    %v516 = vpop.permute.xlu0 %515
    %517 = vrot.lane.b32.xlu0 %v499, 112
    %v518 = vpop.permute.xlu0 %517
    %519 = vrot.lane.b32.xlu0 %v500, 112
    %v520 = vpop.permute.xlu0 %519
    %521 = vrot.lane.b32.xlu0 %v501, 112
    %v522 = vpop.permute.xlu0 %521
    %523 = vrot.lane.b32.xlu0 %v502, 112
    %v524 = vpop.permute.xlu0 %523
    %525 = vrot.lane.b32.xlu0 %v503, 112
    %v526 = vpop.permute.xlu0 %525
    %527 = vrot.lane.b32.xlu0 %v504, 112
    %v528 = vpop.permute.xlu0 %527
    %529 = vrot.lane.b32.xlu0 %v497, 12
    %v530 = vpop.permute.xlu0 %529
    %531 = vrot.lane.b32.xlu0 %v498, 12
    %v532 = vpop.permute.xlu0 %531
    %533 = vrot.lane.b32.xlu0 %v499, 12
    %v534 = vpop.permute.xlu0 %533
    %535 = vrot.lane.b32.xlu0 %v500, 12
    %v536 = vpop.permute.xlu0 %535
    %537 = vrot.lane.b32.xlu0 %v501, 12
    %v538 = vpop.permute.xlu0 %537
    %539 = vrot.lane.b32.xlu0 %v502, 12
    %v540 = vpop.permute.xlu0 %539
    %541 = vrot.lane.b32.xlu0 %v503, 12
    %v542 = vpop.permute.xlu0 %541
    %543 = vrot.lane.b32.xlu0 %v504, 12
    %v544 = vpop.permute.xlu0 %543
    %545 = vrot.lane.b32.xlu0 %v514, 12
    %v546 = vpop.permute.xlu0 %545
    %547 = vrot.lane.b32.xlu0 %v516, 12
    %v548 = vpop.permute.xlu0 %547
    %549 = vrot.lane.b32.xlu0 %v518, 12
    %v550 = vpop.permute.xlu0 %549
    %551 = vrot.lane.b32.xlu0 %v520, 12
    %v552 = vpop.permute.xlu0 %551
    %553 = vrot.lane.b32.xlu0 %v522, 12
    %v554 = vpop.permute.xlu0 %553
    %555 = vrot.lane.b32.xlu0 %v524, 12
    %v556 = vpop.permute.xlu0 %555
    %557 = vrot.lane.b32.xlu0 %v526, 12
    %v558 = vpop.permute.xlu0 %557
    %559 = vrot.lane.b32.xlu0 %v528, 12
    %v560 = vpop.permute.xlu0 %559
    %v577 = vsel %vm282, %v405, %v530
    %v578 = vsel %vm282, %v406, %v532
    %v579 = vsel %vm282, %v407, %v534
    %v580 = vsel %vm282, %v408, %v536
    %v581 = vsel %vm282, %v409, %v538
    %v582 = vsel %vm282, %v410, %v540
    %v583 = vsel %vm282, %v411, %v542
    %v584 = vsel %vm282, %v412, %v544
    %v585 = vsel %vm282, %v422, %v546
    %v586 = vsel %vm282, %v424, %v548
    %v587 = vsel %vm282, %v426, %v550
    %v588 = vsel %vm282, %v428, %v552
    %v589 = vsel %vm282, %v430, %v554
    %v590 = vsel %vm282, %v432, %v556
    %v591 = vsel %vm282, %v434, %v558
    %v592 = vsel %vm282, %v436, %v560
    %594 = vset.pattern.permute.xlu0 0
    %595 = vperm.xlu0 %594, %v348
    %v596 = vpop.permute.xlu0 %595
    %598 = vmatprep.subr.mxu0 0.0
    %599 = vmatpush1.msra.mxu0 %v592
    %600 = vmatprep.subr.mxu0 0.0
    %601 = vmatpush1.msra.mxu0 %v591
    %602 = vmatprep.subr.mxu0 0.0
    %603 = vmatpush1.msra.mxu0 %v590
    %604 = vmatprep.subr.mxu0 0.0
    %605 = vmatpush1.msra.mxu0 %v589
    %606 = vmatprep.subr.mxu0 0.0
    %607 = vmatpush1.msra.mxu0 %v588
    %608 = vmatprep.subr.mxu0 0.0
    %609 = vmatpush1.msra.mxu0 %v587
    %610 = vmatprep.subr.mxu0 0.0
    %611 = vmatpush1.msra.mxu0 %v586
    %612 = vmatprep.subr.mxu0 0.0
    %613 = vmatpush1.msra.mxu0 %v585
    %614 = vmatprep.subr.mxu0 0.0
    %615 = vmatpush1.msra.mxu0 %v584
    %616 = vmatprep.subr.mxu0 0.0
    %617 = vmatpush1.msra.mxu0 %v583
    %618 = vmatprep.subr.mxu0 0.0
    %619 = vmatpush1.msra.mxu0 %v582
    %620 = vmatprep.subr.mxu0 0.0
    %621 = vmatpush1.msra.mxu0 %v581
    %622 = vmatprep.subr.mxu0 0.0
    %623 = vmatpush1.msra.mxu0 %v580
    %624 = vmatprep.subr.mxu0 0.0
    %625 = vmatpush1.msra.mxu0 %v579
    %626 = vmatprep.subr.mxu0 0.0
    %627 = vmatpush1.msra.mxu0 %v578
    %628 = vmatprep.subr.mxu0 0.0
    %629 = vmatpush1.msra.mxu0 %v577
    %630 = vmatprep.subr.mxu0 0.0
    %631 = vmatpush2.msra.mxu0 0.0
    %632 = vmatprep.subr.mxu0 0.0
    %633 = vmatpush2.msra.mxu0 0.0
    %634 = vmatprep.subr.mxu0 0.0
    %635 = vmatpush2.msra.mxu0 0.0
    %636 = vmatprep.subr.mxu0 0.0
    %637 = vmatpush2.msra.mxu0 0.0
    %638 = vmatprep.subr.mxu0 0.0
    %639 = vmatpush2.msra.mxu0 0.0
    %640 = vmatprep.subr.mxu0 0.0
    %641 = vmatpush2.msra.mxu0 0.0
    %642 = vmatprep.subr.mxu0 0.0
    %643 = vmatpush2.msra.mxu0 0.0
    %644 = vmatprep.subr.mxu0 0.0
    %645 = vmatpush2.msra.mxu0 0.0
    %646 = vmatprep.subr.mxu0 0.0
    %647 = vmatpush2.msra.mxu0 0.0
    %648 = vmatprep.subr.mxu0 0.0
    %649 = vmatpush2.msra.mxu0 0.0
    %650 = vmatprep.subr.mxu0 0.0
    %651 = vmatpush2.msra.mxu0 0.0
    %652 = vmatprep.subr.mxu0 0.0
    %653 = vmatpush2.msra.mxu0 0.0
    %654 = vmatprep.subr.mxu0 0.0
    %655 = vmatpush2.msra.mxu0 0.0
    %656 = vmatprep.subr.mxu0 0.0
    %657 = vmatpush2.msra.mxu0 0.0
    %658 = vmatprep.subr.mxu0 0.0
    %659 = vmatpush2.msra.mxu0 0.0
    %660 = vmatprep.subr.mxu0 0.0
    %661 = vmatpush2.msra.mxu0 0.0
    %662 = vmatprep.mubr.f32.mxu0 0.0
    %663 = vmatmul.mubr.f32.gmra.mxu0 %v347
    %v664 = vpop.f32.mrf.mxu0
    %v665 = vadd.f32 %v596, %v664
    %v666 = vpop.f32.mrf.mxu0
    %667 = vdwg.mxu0
    %v669 = vrot.slane %v665, 1
    %670 = vrot.lane.b32.xlu0 %v669, 12
    %v671 = vpop.permute.xlu0 %670
    %v673 = vrot.slane %v665, 2
    %674 = vrot.lane.b32.xlu0 %v673, 24
    %v675 = vpop.permute.xlu0 %674
    %v677 = vrot.slane %v665, 3
    %678 = vrot.lane.b32.xlu0 %v677, 36
    %v679 = vpop.permute.xlu0 %678
    %v681 = vsel %vm282, %v665, %v671
    %vm682 = vcmask 195584
    %v683 = vsel %vm682, %v681, %v675
    %vm684 = vcmask 293888
    %v685 = vsel %vm684, %v683, %v679
    %686 = vrot.lane.b32.xlu0 %v665, 116
    %v687 = vpop.permute.xlu0 %686
    %690 = vrot.lane.b32.xlu0 %v673, 12
    %v691 = vpop.permute.xlu0 %690
    %693 = vrot.lane.b32.xlu0 %v677, 24
    %v694 = vpop.permute.xlu0 %693
    %v696 = vsel %vm282, %v687, %v669
    %v697 = vsel %vm682, %v696, %v691
    %v698 = vsel %vm684, %v697, %v694
    %v700 = vrot.slane %v685, 3
    %v703 = vrot.slane %v698, 6
    %v705 = vrot.slane %v698, 1
    %v707 = vsel %vm312, %v685, %v700
    %v708 = vsel %vm314, %v707, %v703
    %v709 = vsel %vm316, %v708, %v705
    %v710 = vld [vmem:[%s7] sm:$0xff]
    %v711 = vld [vmem:[%s7 + $0x8] sm:$0xff]
    %v712 = vld [vmem:[%s7 + $0x10] sm:$0xff]
    %v713 = vld [vmem:[%s7 + $0x18] sm:$0xff]
    %v714 = vld [vmem:[%s7 + $0x20] sm:$0xff]
    %v715 = vld [vmem:[%s7 + $0x28] sm:$0xff]
    %vm716 = vcmask 392192
    %v718 = vsel %vm716, %v709, 0
    %720 = vmatprep.subr.mxu0 0.0
    %721 = vmatpush1.msra.mxu0 0.0
    %722 = vmatprep.subr.mxu0 0.0
    %723 = vmatpush1.msra.mxu0 0.0
    %724 = vmatprep.subr.mxu0 0.0
    %725 = vmatpush1.msra.mxu0 0.0
    %726 = vmatprep.subr.mxu0 0.0
    %727 = vmatpush1.msra.mxu0 0.0
    %728 = vmatprep.subr.mxu0 0.0
    %729 = vmatpush1.msra.mxu0 0.0
    %730 = vmatprep.subr.mxu0 0.0
    %731 = vmatpush1.msra.mxu0 0.0
    %732 = vmatprep.subr.mxu0 0.0
    %733 = vmatpush1.msra.mxu0 0.0
    %734 = vmatprep.subr.mxu0 0.0
    %735 = vmatpush1.msra.mxu0 0.0
    %736 = vmatprep.subr.mxu0 0.0
    %737 = vmatpush1.msra.mxu0 0.0
    %738 = vmatprep.subr.mxu0 0.0
    %739 = vmatpush1.msra.mxu0 0.0
    %740 = vmatprep.subr.mxu0 0.0
    %741 = vmatpush1.msra.mxu0 %v715
    %742 = vmatprep.subr.mxu0 0.0
    %743 = vmatpush1.msra.mxu0 %v714
    %744 = vmatprep.subr.mxu0 0.0
    %745 = vmatpush1.msra.mxu0 %v713
    %746 = vmatprep.subr.mxu0 0.0
    %747 = vmatpush1.msra.mxu0 %v712
    %748 = vmatprep.subr.mxu0 0.0
    %749 = vmatpush1.msra.mxu0 %v711
    %750 = vmatprep.subr.mxu0 0.0
    %751 = vmatpush1.msra.mxu0 %v710
    %752 = vmatprep.subr.mxu0 0.0
    %753 = vmatpush2.msra.mxu0 0.0
    %754 = vmatprep.subr.mxu0 0.0
    %755 = vmatpush2.msra.mxu0 0.0
    %756 = vmatprep.subr.mxu0 0.0
    %757 = vmatpush2.msra.mxu0 0.0
    %758 = vmatprep.subr.mxu0 0.0
    %759 = vmatpush2.msra.mxu0 0.0
    %760 = vmatprep.subr.mxu0 0.0
    %761 = vmatpush2.msra.mxu0 0.0
    %762 = vmatprep.subr.mxu0 0.0
    %763 = vmatpush2.msra.mxu0 0.0
    %764 = vmatprep.subr.mxu0 0.0
    %765 = vmatpush2.msra.mxu0 0.0
    %766 = vmatprep.subr.mxu0 0.0
    %767 = vmatpush2.msra.mxu0 0.0
    %768 = vmatprep.subr.mxu0 0.0
    %769 = vmatpush2.msra.mxu0 0.0
    %770 = vmatprep.subr.mxu0 0.0
    %771 = vmatpush2.msra.mxu0 0.0
    %772 = vmatprep.subr.mxu0 0.0
    %773 = vmatpush2.msra.mxu0 0.0
    %774 = vmatprep.subr.mxu0 0.0
    %775 = vmatpush2.msra.mxu0 0.0
    %776 = vmatprep.subr.mxu0 0.0
    %777 = vmatpush2.msra.mxu0 0.0
    %778 = vmatprep.subr.mxu0 0.0
    %779 = vmatpush2.msra.mxu0 0.0
    %780 = vmatprep.subr.mxu0 0.0
    %781 = vmatpush2.msra.mxu0 0.0
    %782 = vmatprep.subr.mxu0 0.0
    %783 = vmatpush2.msra.mxu0 0.0
    %784 = vmatprep.mubr.f32.mxu0 0.0
    %785 = vmatmul.mubr.f32.gmra.mxu0 %v718
    %v786 = vpop.f32.mrf.mxu0
    %v787 = vadd.f32 0.0, %v786
    %v788 = vpop.f32.mrf.mxu0
    %789 = vdwg.mxu0
    %vm790 = vcmp.gt.f32.partialorder %v787, 0.0
    %v791 = vmul.f32 %v787, 0.2
    %v792 = vsel %vm790, %v787, %v791
    %v794 = vrot.slane %v792, 2
    %795 = vrot.lane.b32.xlu0 %v794, 12
    %v796 = vpop.permute.xlu0 %795
    %v798 = vsel %vm282, %v792, %v796
    %799 = vrot.lane.b32.xlu0 %v792, 116
    %v800 = vpop.permute.xlu0 %799
    %v803 = vsel %vm282, %v800, %v794
    %804 = vrot.lane.b32.xlu0 %v792, 104
    %v805 = vpop.permute.xlu0 %804
    %807 = vrot.lane.b32.xlu0 %v794, 116
    %v808 = vpop.permute.xlu0 %807
    %v810 = vsel %vm282, %v805, %v808
    %811 = vrot.lane.b32.xlu0 %v792, 92
    %v812 = vpop.permute.xlu0 %811
    %814 = vrot.lane.b32.xlu0 %v794, 104
    %v815 = vpop.permute.xlu0 %814
    %v817 = vsel %vm282, %v812, %v815
    %v819 = vrot.slane %v803, 7
    %v822 = vrot.slane %v810, 6
    %v825 = vrot.slane %v817, 5
    %v828 = vrot.slane %v798, 5
    %v830 = vrot.slane %v803, 4
    %v832 = vrot.slane %v810, 3
    %v834 = vrot.slane %v817, 2
    %v836 = vsel %vm312, %v798, %v819
    %v837 = vsel %vm314, %v836, %v822
    %v838 = vsel %vm316, %v837, %v825
    %v839 = vsel %vm404, %v838, %v828
    %vm840 = vcmask 1044480
    %v841 = vsel %vm840, %v839, %v830
    %vm842 = vcmask 1045504
    %v843 = vsel %vm842, %v841, %v832
    %vm844 = vcmask 1046528
    %v845 = vsel %vm844, %v843, %v834
    %v846 = vld [vmem:[#allocation5] sm:$0xff]
    %v847 = vld [vmem:[#allocation5 + $0x8] sm:$0xff]
    %v848 = vld [vmem:[#allocation5 + $0x10] sm:$0xf]
    %v849 = vld [vmem:[#allocation5 + $0x18] sm:$0xf]
    %v850 = vld [vmem:[%s9] sm:$0xff]
    %v851 = vld [vmem:[%s9 + $0x8] sm:$0xf]
    %853 = vrot.lane.b32.xlu0 %v845, 11
    %v854 = vpop.permute.xlu0 %853
    %vm856 = vcmask 89088
    %v857 = vsel %vm856, 0.0, %v854
    %vm858 = vcmask 187392
    %v859 = vsel %vm858, %v857, 0.0
    %861 = vrot.lane.b32.xlu0 %v859, 127
    %v862 = vpop.permute.xlu0 %861
    %864 = vrot.lane.b32.xlu0 %v859, 126
    %v865 = vpop.permute.xlu0 %864
    %867 = vrot.lane.b32.xlu0 %v859, 125
    %v868 = vpop.permute.xlu0 %867
    %870 = vrot.lane.b32.xlu0 %v859, 124
    %v871 = vpop.permute.xlu0 %870
    %873 = vrot.lane.b32.xlu0 %v859, 123
    %v874 = vpop.permute.xlu0 %873
    %876 = vrot.lane.b32.xlu0 %v859, 122
    %v877 = vpop.permute.xlu0 %876
    %879 = vrot.lane.b32.xlu0 %v859, 121
    %v880 = vpop.permute.xlu0 %879
    %882 = vrot.lane.b32.xlu0 %v859, 120
    %v883 = vpop.permute.xlu0 %882
    %885 = vrot.lane.b32.xlu0 %v859, 119
    %v886 = vpop.permute.xlu0 %885
    %888 = vrot.lane.b32.xlu0 %v859, 118
    %v889 = vpop.permute.xlu0 %888
    %891 = vrot.lane.b32.xlu0 %v859, 117
    %v892 = vpop.permute.xlu0 %891
    %894 = vrot.lane.b32.xlu0 %v859, 116
    %v895 = vpop.permute.xlu0 %894
    %897 = vrot.lane.b32.xlu0 %v859, 115
    %v898 = vpop.permute.xlu0 %897
    %900 = vrot.lane.b32.xlu0 %v859, 114
    %v901 = vpop.permute.xlu0 %900
    %903 = vrot.lane.b32.xlu0 %v859, 113
    %v904 = vpop.permute.xlu0 %903
    %906 = vrot.lane.b32.xlu0 %v859, 112
    %v907 = vpop.permute.xlu0 %906
    %908 = vrot.lane.b32.xlu0 %v862, 112
    %v909 = vpop.permute.xlu0 %908
    %910 = vrot.lane.b32.xlu0 %v865, 112
    %v911 = vpop.permute.xlu0 %910
    %912 = vrot.lane.b32.xlu0 %v868, 112
    %v913 = vpop.permute.xlu0 %912
    %914 = vrot.lane.b32.xlu0 %v871, 112
    %v915 = vpop.permute.xlu0 %914
    %916 = vrot.lane.b32.xlu0 %v874, 112
    %v917 = vpop.permute.xlu0 %916
    %918 = vrot.lane.b32.xlu0 %v877, 112
    %v919 = vpop.permute.xlu0 %918
    %920 = vrot.lane.b32.xlu0 %v880, 112
    %v921 = vpop.permute.xlu0 %920
    %930 = vrot.lane.b32.xlu0 %v845, 127
    %v931 = vpop.permute.xlu0 %930
    %v933 = vsel %vm856, 0.0, %v931
    %v934 = vsel %vm858, %v933, 0.0
    %936 = vrot.lane.b32.xlu0 %v934, 127
    %v937 = vpop.permute.xlu0 %936
    %938 = vrot.lane.b32.xlu0 %v934, 126
    %v939 = vpop.permute.xlu0 %938
    %940 = vrot.lane.b32.xlu0 %v934, 125
    %v941 = vpop.permute.xlu0 %940
    %942 = vrot.lane.b32.xlu0 %v934, 124
    %v943 = vpop.permute.xlu0 %942
    %944 = vrot.lane.b32.xlu0 %v934, 123
    %v945 = vpop.permute.xlu0 %944
    %946 = vrot.lane.b32.xlu0 %v934, 122
    %v947 = vpop.permute.xlu0 %946
    %948 = vrot.lane.b32.xlu0 %v934, 121
    %v949 = vpop.permute.xlu0 %948
    %950 = vrot.lane.b32.xlu0 %v934, 120
    %v951 = vpop.permute.xlu0 %950
    %952 = vrot.lane.b32.xlu0 %v934, 119
    %v953 = vpop.permute.xlu0 %952
    %954 = vrot.lane.b32.xlu0 %v934, 118
    %v955 = vpop.permute.xlu0 %954
    %956 = vrot.lane.b32.xlu0 %v934, 117
    %v957 = vpop.permute.xlu0 %956
    %958 = vrot.lane.b32.xlu0 %v934, 116
    %v959 = vpop.permute.xlu0 %958
    %960 = vrot.lane.b32.xlu0 %v934, 115
    %v961 = vpop.permute.xlu0 %960
    %962 = vrot.lane.b32.xlu0 %v934, 114
    %v963 = vpop.permute.xlu0 %962
    %964 = vrot.lane.b32.xlu0 %v934, 113
    %v965 = vpop.permute.xlu0 %964
    %966 = vrot.lane.b32.xlu0 %v934, 112
    %v967 = vpop.permute.xlu0 %966
    %968 = vrot.lane.b32.xlu0 %v937, 112
    %v969 = vpop.permute.xlu0 %968
    %970 = vrot.lane.b32.xlu0 %v939, 112
    %v971 = vpop.permute.xlu0 %970
    %972 = vrot.lane.b32.xlu0 %v941, 112
    %v973 = vpop.permute.xlu0 %972
    %974 = vrot.lane.b32.xlu0 %v943, 112
    %v975 = vpop.permute.xlu0 %974
    %976 = vrot.lane.b32.xlu0 %v945, 112
    %v977 = vpop.permute.xlu0 %976
    %978 = vrot.lane.b32.xlu0 %v947, 112
    %v979 = vpop.permute.xlu0 %978
    %980 = vrot.lane.b32.xlu0 %v949, 112
    %v981 = vpop.permute.xlu0 %980
    %982 = vrot.lane.b32.xlu0 %v934, 12
    %v983 = vpop.permute.xlu0 %982
    %984 = vrot.lane.b32.xlu0 %v937, 12
    %v985 = vpop.permute.xlu0 %984
    %986 = vrot.lane.b32.xlu0 %v939, 12
    %v987 = vpop.permute.xlu0 %986
    %988 = vrot.lane.b32.xlu0 %v941, 12
    %v989 = vpop.permute.xlu0 %988
    %990 = vrot.lane.b32.xlu0 %v943, 12
    %v991 = vpop.permute.xlu0 %990
    %992 = vrot.lane.b32.xlu0 %v945, 12
    %v993 = vpop.permute.xlu0 %992
    %994 = vrot.lane.b32.xlu0 %v947, 12
    %v995 = vpop.permute.xlu0 %994
    %996 = vrot.lane.b32.xlu0 %v949, 12
    %v997 = vpop.permute.xlu0 %996
    %998 = vrot.lane.b32.xlu0 %v951, 12
    %v999 = vpop.permute.xlu0 %998
    %1000 = vrot.lane.b32.xlu0 %v953, 12
    %v1001 = vpop.permute.xlu0 %1000
    %1002 = vrot.lane.b32.xlu0 %v955, 12
    %v1003 = vpop.permute.xlu0 %1002
    %1004 = vrot.lane.b32.xlu0 %v957, 12
    %v1005 = vpop.permute.xlu0 %1004
    %1006 = vrot.lane.b32.xlu0 %v959, 12
    %v1007 = vpop.permute.xlu0 %1006
    %1008 = vrot.lane.b32.xlu0 %v961, 12
    %v1009 = vpop.permute.xlu0 %1008
    %1010 = vrot.lane.b32.xlu0 %v963, 12
    %v1011 = vpop.permute.xlu0 %1010
    %1012 = vrot.lane.b32.xlu0 %v965, 12
    %v1013 = vpop.permute.xlu0 %1012
    %1014 = vrot.lane.b32.xlu0 %v967, 12
    %v1015 = vpop.permute.xlu0 %1014
    %1016 = vrot.lane.b32.xlu0 %v969, 12
    %v1017 = vpop.permute.xlu0 %1016
    %1018 = vrot.lane.b32.xlu0 %v971, 12
    %v1019 = vpop.permute.xlu0 %1018
    %1020 = vrot.lane.b32.xlu0 %v973, 12
    %v1021 = vpop.permute.xlu0 %1020
    %1022 = vrot.lane.b32.xlu0 %v975, 12
    %v1023 = vpop.permute.xlu0 %1022
    %1024 = vrot.lane.b32.xlu0 %v977, 12
    %v1025 = vpop.permute.xlu0 %1024
    %1026 = vrot.lane.b32.xlu0 %v979, 12
    %v1027 = vpop.permute.xlu0 %1026
    %1028 = vrot.lane.b32.xlu0 %v981, 12
    %v1029 = vpop.permute.xlu0 %1028
    %v1054 = vsel %vm282, %v859, %v983
    %v1055 = vsel %vm282, %v862, %v985
    %v1056 = vsel %vm282, %v865, %v987
    %v1057 = vsel %vm282, %v868, %v989
    %v1058 = vsel %vm282, %v871, %v991
    %v1059 = vsel %vm282, %v874, %v993
    %v1060 = vsel %vm282, %v877, %v995
    %v1061 = vsel %vm282, %v880, %v997
    %v1062 = vsel %vm282, %v883, %v999
    %v1063 = vsel %vm282, %v886, %v1001
    %v1064 = vsel %vm282, %v889, %v1003
    %v1065 = vsel %vm282, %v892, %v1005
    %v1066 = vsel %vm282, %v895, %v1007
    %v1067 = vsel %vm282, %v898, %v1009
    %v1068 = vsel %vm282, %v901, %v1011
    %v1069 = vsel %vm282, %v904, %v1013
    %v1070 = vsel %vm282, %v907, %v1015
    %v1071 = vsel %vm282, %v909, %v1017
    %v1072 = vsel %vm282, %v911, %v1019
    %v1073 = vsel %vm282, %v913, %v1021
    %v1074 = vsel %vm282, %v915, %v1023
    %v1075 = vsel %vm282, %v917, %v1025
    %v1076 = vsel %vm282, %v919, %v1027
    %v1077 = vsel %vm282, %v921, %v1029
    %1079 = vset.pattern.permute.xlu0 0
    %1080 = vperm.xlu0 %1079, %v850
    %v1081 = vpop.permute.xlu0 %1080
    %1084 = vset.pattern.permute.xlu0 0
    %1085 = vperm.xlu0 %1084, %v851
    %v1086 = vpop.permute.xlu0 %1085
    %vm1088 = vcmask 523264
    %v1090 = vsel %vm1088, %v847, 0
    %v1093 = vsel %vm1088, %v849, 0
    %1095 = vmatprep.subr.mxu0 0.0
    %1096 = vmatpush1.msra.mxu0 %v1069
    %1097 = vmatprep.subr.mxu0 0.0
    %1098 = vmatpush1.msra.mxu0 %v1068
    %1099 = vmatprep.subr.mxu0 0.0
    %1100 = vmatpush1.msra.mxu0 %v1067
    %1101 = vmatprep.subr.mxu0 0.0
    %1102 = vmatpush1.msra.mxu0 %v1066
    %1103 = vmatprep.subr.mxu0 0.0
    %1104 = vmatpush1.msra.mxu0 %v1065
    %1105 = vmatprep.subr.mxu0 0.0
    %1106 = vmatpush1.msra.mxu0 %v1064
    %1107 = vmatprep.subr.mxu0 0.0
    %1108 = vmatpush1.msra.mxu0 %v1063
    %1109 = vmatprep.subr.mxu0 0.0
    %1110 = vmatpush1.msra.mxu0 %v1062
    %1111 = vmatprep.subr.mxu0 0.0
    %1112 = vmatpush1.msra.mxu0 %v1061
    %1113 = vmatprep.subr.mxu0 0.0
    %1114 = vmatpush1.msra.mxu0 %v1060
    %1115 = vmatprep.subr.mxu0 0.0
    %1116 = vmatpush1.msra.mxu0 %v1059
    %1117 = vmatprep.subr.mxu0 0.0
    %1118 = vmatpush1.msra.mxu0 %v1058
    %1119 = vmatprep.subr.mxu0 0.0
    %1120 = vmatpush1.msra.mxu0 %v1057
    %1121 = vmatprep.subr.mxu0 0.0
    %1122 = vmatpush1.msra.mxu0 %v1056
    %1123 = vmatprep.subr.mxu0 0.0
    %1124 = vmatpush1.msra.mxu0 %v1055
    %1125 = vmatprep.subr.mxu0 0.0
    %1126 = vmatpush1.msra.mxu0 %v1054
    %1127 = vmatprep.subr.mxu0 0.0
    %1128 = vmatpush2.msra.mxu0 0.0
    %1129 = vmatprep.subr.mxu0 0.0
    %1130 = vmatpush2.msra.mxu0 0.0
    %1131 = vmatprep.subr.mxu0 0.0
    %1132 = vmatpush2.msra.mxu0 0.0
    %1133 = vmatprep.subr.mxu0 0.0
    %1134 = vmatpush2.msra.mxu0 0.0
    %1135 = vmatprep.subr.mxu0 0.0
    %1136 = vmatpush2.msra.mxu0 0.0
    %1137 = vmatprep.subr.mxu0 0.0
    %1138 = vmatpush2.msra.mxu0 0.0
    %1139 = vmatprep.subr.mxu0 0.0
    %1140 = vmatpush2.msra.mxu0 0.0
    %1141 = vmatprep.subr.mxu0 0.0
    %1142 = vmatpush2.msra.mxu0 0.0
    %1143 = vmatprep.subr.mxu0 0.0
    %1144 = vmatpush2.msra.mxu0 %v1077
    %1145 = vmatprep.subr.mxu0 0.0
    %1146 = vmatpush2.msra.mxu0 %v1076
    %1147 = vmatprep.subr.mxu0 0.0
    %1148 = vmatpush2.msra.mxu0 %v1075
    %1149 = vmatprep.subr.mxu0 0.0
    %1150 = vmatpush2.msra.mxu0 %v1074
    %1151 = vmatprep.subr.mxu0 0.0
    %1152 = vmatpush2.msra.mxu0 %v1073
    %1153 = vmatprep.subr.mxu0 0.0
    %1154 = vmatpush2.msra.mxu0 %v1072
    %1155 = vmatprep.subr.mxu0 0.0
    %1156 = vmatpush2.msra.mxu0 %v1071
    %1157 = vmatprep.subr.mxu0 0.0
    %1158 = vmatpush2.msra.mxu0 %v1070
    %1159 = vmatprep.mubr.f32.mxu0 %v1090
    %1160 = vmatmul.mubr.f32.gmra.mxu0 %v846
    %v1161 = vpop.f32.mrf.mxu0
    %v1162 = vadd.f32 %v1081, %v1161
    %v1163 = vpop.f32.mrf.mxu0
    %1164 = vmatprep.mubr.f32.mxu0 %v1093
    %1165 = vmatmul.mubr.f32.gmra.mxu0 %v848
    %v1166 = vpop.f32.mrf.mxu0
    %v1167 = vadd.f32 %v1086, %v1166
    %v1168 = vpop.f32.mrf.mxu0
    %1169 = vdwg.mxu0
    %vm1170 = vcmp.gt.f32.partialorder %v1162, 0.0
    %vm1171 = vcmp.gt.f32.partialorder %v1167, 0.0
    %v1172 = vmul.f32 %v1162, 0.2
    %v1173 = vmul.f32 %v1167, 0.2
    %v1174 = vsel %vm1170, %v1162, %v1172
    %v1175 = vsel %vm1171, %v1167, %v1173
    %v1176 = vld [vmem:[#allocation7] sm:$0xff]
    %v1177 = vld [vmem:[#allocation7 + $0x8] sm:$0xff]
    %v1178 = vld [vmem:[#allocation7 + $0x10] sm:$0xff]
    %v1179 = vld [vmem:[#allocation7 + $0x18] sm:$0xff]
    %v1180 = vld [vmem:[%s11] sm:$0xff]
    %v1181 = vld [vmem:[%s11 + $0x8] sm:$0xff]
    %1184 = vrot.lane.b32.xlu0 %v1174, 9
    %v1185 = vpop.permute.xlu0 %1184
    %1186 = vrot.lane.b32.xlu0 %v1175, 9
    %v1187 = vpop.permute.xlu0 %1186
    %vm1190 = vcmask 72704
    %v1191 = vsel %vm1190, 0.0, %v1185
    %v1192 = vsel %vm1190, 0.0, %v1187
    %vm1193 = vcmask 171008
    %v1194 = vsel %vm1193, %v1191, 0.0
    %v1195 = vsel %vm1193, %v1192, 0.0
    %v1198 = vrot.slane %v1194, 4
    %v1199 = vrot.slane %v1195, 4
    %v1200 = vsel %vm404, %v1198, %v1199
    %1201 = vrot.lane.b32.xlu0 %v1198, 127
    %v1202 = vpop.permute.xlu0 %1201
    %1203 = vrot.lane.b32.xlu0 %v1200, 127
    %v1204 = vpop.permute.xlu0 %1203
    %1207 = vrot.lane.b32.xlu0 %v1194, 126
    %v1208 = vpop.permute.xlu0 %1207
    %1209 = vrot.lane.b32.xlu0 %v1195, 126
    %v1210 = vpop.permute.xlu0 %1209
    %1213 = vrot.lane.b32.xlu0 %v1198, 125
    %v1214 = vpop.permute.xlu0 %1213
    %1215 = vrot.lane.b32.xlu0 %v1200, 125
    %v1216 = vpop.permute.xlu0 %1215
    %1219 = vrot.lane.b32.xlu0 %v1194, 124
    %v1220 = vpop.permute.xlu0 %1219
    %1221 = vrot.lane.b32.xlu0 %v1195, 124
    %v1222 = vpop.permute.xlu0 %1221
    %1225 = vrot.lane.b32.xlu0 %v1198, 123
    %v1226 = vpop.permute.xlu0 %1225
    %1227 = vrot.lane.b32.xlu0 %v1200, 123
    %v1228 = vpop.permute.xlu0 %1227
    %1231 = vrot.lane.b32.xlu0 %v1194, 122
    %v1232 = vpop.permute.xlu0 %1231
    %1233 = vrot.lane.b32.xlu0 %v1195, 122
    %v1234 = vpop.permute.xlu0 %1233
    %1237 = vrot.lane.b32.xlu0 %v1198, 121
    %v1238 = vpop.permute.xlu0 %1237
    %1239 = vrot.lane.b32.xlu0 %v1200, 121
    %v1240 = vpop.permute.xlu0 %1239
    %1243 = vrot.lane.b32.xlu0 %v1194, 120
    %v1244 = vpop.permute.xlu0 %1243
    %1245 = vrot.lane.b32.xlu0 %v1195, 120
    %v1246 = vpop.permute.xlu0 %1245
    %1249 = vrot.lane.b32.xlu0 %v1198, 119
    %v1250 = vpop.permute.xlu0 %1249
    %1251 = vrot.lane.b32.xlu0 %v1200, 119
    %v1252 = vpop.permute.xlu0 %1251
    %1255 = vrot.lane.b32.xlu0 %v1194, 118
    %v1256 = vpop.permute.xlu0 %1255
    %1257 = vrot.lane.b32.xlu0 %v1195, 118
    %v1258 = vpop.permute.xlu0 %1257
    %1261 = vrot.lane.b32.xlu0 %v1198, 117
    %v1262 = vpop.permute.xlu0 %1261
    %1263 = vrot.lane.b32.xlu0 %v1200, 117
    %v1264 = vpop.permute.xlu0 %1263
    %1267 = vrot.lane.b32.xlu0 %v1194, 116
    %v1268 = vpop.permute.xlu0 %1267
    %1269 = vrot.lane.b32.xlu0 %v1195, 116
    %v1270 = vpop.permute.xlu0 %1269
    %1273 = vrot.lane.b32.xlu0 %v1198, 115
    %v1274 = vpop.permute.xlu0 %1273
    %1275 = vrot.lane.b32.xlu0 %v1200, 115
    %v1276 = vpop.permute.xlu0 %1275
    %1279 = vrot.lane.b32.xlu0 %v1194, 114
    %v1280 = vpop.permute.xlu0 %1279
    %1281 = vrot.lane.b32.xlu0 %v1195, 114
    %v1282 = vpop.permute.xlu0 %1281
    %1285 = vrot.lane.b32.xlu0 %v1198, 113
    %v1286 = vpop.permute.xlu0 %1285
    %1287 = vrot.lane.b32.xlu0 %v1200, 113
    %v1288 = vpop.permute.xlu0 %1287
    %v1291 = vsel %vm404, %v1195, %v1202
    %v1292 = vsel %vm404, %v1210, %v1214
    %v1293 = vsel %vm404, %v1222, %v1226
    %v1294 = vsel %vm404, %v1234, %v1238
    %v1295 = vsel %vm404, %v1246, %v1250
    %v1296 = vsel %vm404, %v1258, %v1262
    %v1297 = vsel %vm404, %v1270, %v1274
    %v1298 = vsel %vm404, %v1282, %v1286
    %1301 = vrot.lane.b32.xlu0 %v1194, 112
    %v1302 = vpop.permute.xlu0 %1301
    %1303 = vrot.lane.b32.xlu0 %v1291, 112
    %v1304 = vpop.permute.xlu0 %1303
    %1305 = vrot.lane.b32.xlu0 %v1204, 112
    %v1306 = vpop.permute.xlu0 %1305
    %1307 = vrot.lane.b32.xlu0 %v1208, 112
    %v1308 = vpop.permute.xlu0 %1307
    %1309 = vrot.lane.b32.xlu0 %v1292, 112
    %v1310 = vpop.permute.xlu0 %1309
    %1311 = vrot.lane.b32.xlu0 %v1216, 112
    %v1312 = vpop.permute.xlu0 %1311
    %1319 = vrot.lane.b32.xlu0 %v1174, 125
    %v1320 = vpop.permute.xlu0 %1319
    %1321 = vrot.lane.b32.xlu0 %v1175, 125
    %v1322 = vpop.permute.xlu0 %1321
    %v1325 = vsel %vm1190, 0.0, %v1320
    %v1326 = vsel %vm1190, 0.0, %v1322
    %v1327 = vsel %vm1193, %v1325, 0.0
    %v1328 = vsel %vm1193, %v1326, 0.0
    %v1331 = vrot.slane %v1327, 4
    %v1332 = vrot.slane %v1328, 4
    %v1333 = vsel %vm404, %v1331, %v1332
    %1334 = vrot.lane.b32.xlu0 %v1331, 127
    %v1335 = vpop.permute.xlu0 %1334
    %1336 = vrot.lane.b32.xlu0 %v1333, 127
    %v1337 = vpop.permute.xlu0 %1336
    %1339 = vrot.lane.b32.xlu0 %v1327, 126
    %v1340 = vpop.permute.xlu0 %1339
    %1341 = vrot.lane.b32.xlu0 %v1328, 126
    %v1342 = vpop.permute.xlu0 %1341
    %1344 = vrot.lane.b32.xlu0 %v1331, 125
    %v1345 = vpop.permute.xlu0 %1344
    %1346 = vrot.lane.b32.xlu0 %v1333, 125
    %v1347 = vpop.permute.xlu0 %1346
    %1349 = vrot.lane.b32.xlu0 %v1327, 124
    %v1350 = vpop.permute.xlu0 %1349
    %1351 = vrot.lane.b32.xlu0 %v1328, 124
    %v1352 = vpop.permute.xlu0 %1351
    %1354 = vrot.lane.b32.xlu0 %v1331, 123
    %v1355 = vpop.permute.xlu0 %1354
    %1356 = vrot.lane.b32.xlu0 %v1333, 123
    %v1357 = vpop.permute.xlu0 %1356
    %1359 = vrot.lane.b32.xlu0 %v1327, 122
    %v1360 = vpop.permute.xlu0 %1359
    %1361 = vrot.lane.b32.xlu0 %v1328, 122
    %v1362 = vpop.permute.xlu0 %1361
    %1364 = vrot.lane.b32.xlu0 %v1331, 121
    %v1365 = vpop.permute.xlu0 %1364
    %1366 = vrot.lane.b32.xlu0 %v1333, 121
    %v1367 = vpop.permute.xlu0 %1366
    %1369 = vrot.lane.b32.xlu0 %v1327, 120
    %v1370 = vpop.permute.xlu0 %1369
    %1371 = vrot.lane.b32.xlu0 %v1328, 120
    %v1372 = vpop.permute.xlu0 %1371
    %1374 = vrot.lane.b32.xlu0 %v1331, 119
    %v1375 = vpop.permute.xlu0 %1374
    %1376 = vrot.lane.b32.xlu0 %v1333, 119
    %v1377 = vpop.permute.xlu0 %1376
    %1379 = vrot.lane.b32.xlu0 %v1327, 118
    %v1380 = vpop.permute.xlu0 %1379
    %1381 = vrot.lane.b32.xlu0 %v1328, 118
    %v1382 = vpop.permute.xlu0 %1381
    %1384 = vrot.lane.b32.xlu0 %v1331, 117
    %v1385 = vpop.permute.xlu0 %1384
    %1386 = vrot.lane.b32.xlu0 %v1333, 117
    %v1387 = vpop.permute.xlu0 %1386
    %1389 = vrot.lane.b32.xlu0 %v1327, 116
    %v1390 = vpop.permute.xlu0 %1389
    %1391 = vrot.lane.b32.xlu0 %v1328, 116
    %v1392 = vpop.permute.xlu0 %1391
    %1394 = vrot.lane.b32.xlu0 %v1331, 115
    %v1395 = vpop.permute.xlu0 %1394
    %1396 = vrot.lane.b32.xlu0 %v1333, 115
    %v1397 = vpop.permute.xlu0 %1396
    %1399 = vrot.lane.b32.xlu0 %v1327, 114
    %v1400 = vpop.permute.xlu0 %1399
    %1401 = vrot.lane.b32.xlu0 %v1328, 114
    %v1402 = vpop.permute.xlu0 %1401
    %1404 = vrot.lane.b32.xlu0 %v1331, 113
    %v1405 = vpop.permute.xlu0 %1404
    %1406 = vrot.lane.b32.xlu0 %v1333, 113
    %v1407 = vpop.permute.xlu0 %1406
    %v1409 = vsel %vm404, %v1328, %v1335
    %v1410 = vsel %vm404, %v1342, %v1345
    %v1411 = vsel %vm404, %v1352, %v1355
    %v1412 = vsel %vm404, %v1362, %v1365
    %v1413 = vsel %vm404, %v1372, %v1375
    %v1414 = vsel %vm404, %v1382, %v1385
    %v1415 = vsel %vm404, %v1392, %v1395
    %v1416 = vsel %vm404, %v1402, %v1405
    %1419 = vrot.lane.b32.xlu0 %v1327, 112
    %v1420 = vpop.permute.xlu0 %1419
    %1421 = vrot.lane.b32.xlu0 %v1409, 112
    %v1422 = vpop.permute.xlu0 %1421
    %1423 = vrot.lane.b32.xlu0 %v1337, 112
    %v1424 = vpop.permute.xlu0 %1423
    %1425 = vrot.lane.b32.xlu0 %v1340, 112
    %v1426 = vpop.permute.xlu0 %1425
    %1427 = vrot.lane.b32.xlu0 %v1410, 112
    %v1428 = vpop.permute.xlu0 %1427
    %1429 = vrot.lane.b32.xlu0 %v1347, 112
    %v1430 = vpop.permute.xlu0 %1429
    %1437 = vrot.lane.b32.xlu0 %v1327, 12
    %v1438 = vpop.permute.xlu0 %1437
    %1439 = vrot.lane.b32.xlu0 %v1409, 12
    %v1440 = vpop.permute.xlu0 %1439
    %1441 = vrot.lane.b32.xlu0 %v1337, 12
    %v1442 = vpop.permute.xlu0 %1441
    %1443 = vrot.lane.b32.xlu0 %v1340, 12
    %v1444 = vpop.permute.xlu0 %1443
    %1445 = vrot.lane.b32.xlu0 %v1410, 12
    %v1446 = vpop.permute.xlu0 %1445
    %1447 = vrot.lane.b32.xlu0 %v1347, 12
    %v1448 = vpop.permute.xlu0 %1447
    %1449 = vrot.lane.b32.xlu0 %v1350, 12
    %v1450 = vpop.permute.xlu0 %1449
    %1451 = vrot.lane.b32.xlu0 %v1411, 12
    %v1452 = vpop.permute.xlu0 %1451
    %1453 = vrot.lane.b32.xlu0 %v1357, 12
    %v1454 = vpop.permute.xlu0 %1453
    %1455 = vrot.lane.b32.xlu0 %v1360, 12
    %v1456 = vpop.permute.xlu0 %1455
    %1457 = vrot.lane.b32.xlu0 %v1412, 12
    %v1458 = vpop.permute.xlu0 %1457
    %1459 = vrot.lane.b32.xlu0 %v1367, 12
    %v1460 = vpop.permute.xlu0 %1459
    %1461 = vrot.lane.b32.xlu0 %v1370, 12
    %v1462 = vpop.permute.xlu0 %1461
    %1463 = vrot.lane.b32.xlu0 %v1413, 12
    %v1464 = vpop.permute.xlu0 %1463
    %1465 = vrot.lane.b32.xlu0 %v1377, 12
    %v1466 = vpop.permute.xlu0 %1465
    %1467 = vrot.lane.b32.xlu0 %v1380, 12
    %v1468 = vpop.permute.xlu0 %1467
    %1469 = vrot.lane.b32.xlu0 %v1414, 12
    %v1470 = vpop.permute.xlu0 %1469
    %1471 = vrot.lane.b32.xlu0 %v1387, 12
    %v1472 = vpop.permute.xlu0 %1471
    %1473 = vrot.lane.b32.xlu0 %v1390, 12
    %v1474 = vpop.permute.xlu0 %1473
    %1475 = vrot.lane.b32.xlu0 %v1415, 12
    %v1476 = vpop.permute.xlu0 %1475
    %1477 = vrot.lane.b32.xlu0 %v1397, 12
    %v1478 = vpop.permute.xlu0 %1477
    %1479 = vrot.lane.b32.xlu0 %v1400, 12
    %v1480 = vpop.permute.xlu0 %1479
    %1481 = vrot.lane.b32.xlu0 %v1416, 12
    %v1482 = vpop.permute.xlu0 %1481
    %1483 = vrot.lane.b32.xlu0 %v1407, 12
    %v1484 = vpop.permute.xlu0 %1483
    %1485 = vrot.lane.b32.xlu0 %v1420, 12
    %v1486 = vpop.permute.xlu0 %1485
    %1487 = vrot.lane.b32.xlu0 %v1422, 12
    %v1488 = vpop.permute.xlu0 %1487
    %1489 = vrot.lane.b32.xlu0 %v1424, 12
    %v1490 = vpop.permute.xlu0 %1489
    %1491 = vrot.lane.b32.xlu0 %v1426, 12
    %v1492 = vpop.permute.xlu0 %1491
    %1493 = vrot.lane.b32.xlu0 %v1428, 12
    %v1494 = vpop.permute.xlu0 %1493
    %1495 = vrot.lane.b32.xlu0 %v1430, 12
    %v1496 = vpop.permute.xlu0 %1495
    %v1527 = vsel %vm282, %v1194, %v1438
    %v1528 = vsel %vm282, %v1291, %v1440
    %v1529 = vsel %vm282, %v1204, %v1442
    %v1530 = vsel %vm282, %v1208, %v1444
    %v1531 = vsel %vm282, %v1292, %v1446
    %v1532 = vsel %vm282, %v1216, %v1448
    %v1533 = vsel %vm282, %v1220, %v1450
    %v1534 = vsel %vm282, %v1293, %v1452
    %v1535 = vsel %vm282, %v1228, %v1454
    %v1536 = vsel %vm282, %v1232, %v1456
    %v1537 = vsel %vm282, %v1294, %v1458
    %v1538 = vsel %vm282, %v1240, %v1460
    %v1539 = vsel %vm282, %v1244, %v1462
    %v1540 = vsel %vm282, %v1295, %v1464
    %v1541 = vsel %vm282, %v1252, %v1466
    %v1542 = vsel %vm282, %v1256, %v1468
    %v1543 = vsel %vm282, %v1296, %v1470
    %v1544 = vsel %vm282, %v1264, %v1472
    %v1545 = vsel %vm282, %v1268, %v1474
    %v1546 = vsel %vm282, %v1297, %v1476
    %v1547 = vsel %vm282, %v1276, %v1478
    %v1548 = vsel %vm282, %v1280, %v1480
    %v1549 = vsel %vm282, %v1298, %v1482
    %v1550 = vsel %vm282, %v1288, %v1484
    %v1551 = vsel %vm282, %v1302, %v1486
    %v1552 = vsel %vm282, %v1304, %v1488
    %v1553 = vsel %vm282, %v1306, %v1490
    %v1554 = vsel %vm282, %v1308, %v1492
    %v1555 = vsel %vm282, %v1310, %v1494
    %v1556 = vsel %vm282, %v1312, %v1496
    %1558 = vset.pattern.permute.xlu0 0
    %1559 = vperm.xlu0 %1558, %v1180
    %v1560 = vpop.permute.xlu0 %1559
    %1563 = vset.pattern.permute.xlu0 0
    %1564 = vperm.xlu0 %1563, %v1181
    %v1565 = vpop.permute.xlu0 %1564
    %vm1567 = vcmask 916480
    %v1569 = vsel %vm1567, %v1177, 0
    %v1572 = vsel %vm1567, %v1179, 0
    %1574 = vmatprep.subr.mxu0 0.0
    %1575 = vmatpush1.msra.mxu0 %v1542
    %1576 = vmatprep.subr.mxu0 0.0
    %1577 = vmatpush1.msra.mxu0 %v1541
    %1578 = vmatprep.subr.mxu0 0.0
    %1579 = vmatpush1.msra.mxu0 %v1540
    %1580 = vmatprep.subr.mxu0 0.0
    %1581 = vmatpush1.msra.mxu0 %v1539
    %1582 = vmatprep.subr.mxu0 0.0
    %1583 = vmatpush1.msra.mxu0 %v1538
    %1584 = vmatprep.subr.mxu0 0.0
    %1585 = vmatpush1.msra.mxu0 %v1537
    %1586 = vmatprep.subr.mxu0 0.0
    %1587 = vmatpush1.msra.mxu0 %v1536
    %1588 = vmatprep.subr.mxu0 0.0
    %1589 = vmatpush1.msra.mxu0 %v1535
    %1590 = vmatprep.subr.mxu0 0.0
    %1591 = vmatpush1.msra.mxu0 %v1534
    %1592 = vmatprep.subr.mxu0 0.0
    %1593 = vmatpush1.msra.mxu0 %v1533
    %1594 = vmatprep.subr.mxu0 0.0
    %1595 = vmatpush1.msra.mxu0 %v1532
    %1596 = vmatprep.subr.mxu0 0.0
    %1597 = vmatpush1.msra.mxu0 %v1531
    %1598 = vmatprep.subr.mxu0 0.0
    %1599 = vmatpush1.msra.mxu0 %v1530
    %1600 = vmatprep.subr.mxu0 0.0
    %1601 = vmatpush1.msra.mxu0 %v1529
    %1602 = vmatprep.subr.mxu0 0.0
    %1603 = vmatpush1.msra.mxu0 %v1528
    %1604 = vmatprep.subr.mxu0 0.0
    %1605 = vmatpush1.msra.mxu0 %v1527
    %1606 = vmatprep.subr.mxu0 0.0
    %1607 = vmatpush2.msra.mxu0 0.0
    %1608 = vmatprep.subr.mxu0 0.0
    %1609 = vmatpush2.msra.mxu0 0.0
    %1610 = vmatprep.subr.mxu0 0.0
    %1611 = vmatpush2.msra.mxu0 %v1556
    %1612 = vmatprep.subr.mxu0 0.0
    %1613 = vmatpush2.msra.mxu0 %v1555
    %1614 = vmatprep.subr.mxu0 0.0
    %1615 = vmatpush2.msra.mxu0 %v1554
    %1616 = vmatprep.subr.mxu0 0.0
    %1617 = vmatpush2.msra.mxu0 %v1553
    %1618 = vmatprep.subr.mxu0 0.0
    %1619 = vmatpush2.msra.mxu0 %v1552
    %1620 = vmatprep.subr.mxu0 0.0
    %1621 = vmatpush2.msra.mxu0 %v1551
    %1622 = vmatprep.subr.mxu0 0.0
    %1623 = vmatpush2.msra.mxu0 %v1550
    %1624 = vmatprep.subr.mxu0 0.0
    %1625 = vmatpush2.msra.mxu0 %v1549
    %1626 = vmatprep.subr.mxu0 0.0
    %1627 = vmatpush2.msra.mxu0 %v1548
    %1628 = vmatprep.subr.mxu0 0.0
    %1629 = vmatpush2.msra.mxu0 %v1547
    %1630 = vmatprep.subr.mxu0 0.0
    %1631 = vmatpush2.msra.mxu0 %v1546
    %1632 = vmatprep.subr.mxu0 0.0
    %1633 = vmatpush2.msra.mxu0 %v1545
    %1634 = vmatprep.subr.mxu0 0.0
    %1635 = vmatpush2.msra.mxu0 %v1544
    %1636 = vmatprep.subr.mxu0 0.0
    %1637 = vmatpush2.msra.mxu0 %v1543
    %1638 = vmatprep.mubr.f32.mxu0 %v1569
    %1639 = vmatmul.mubr.f32.gmra.mxu0 %v1176
    %v1640 = vpop.f32.mrf.mxu0
    %v1641 = vadd.f32 %v1560, %v1640
    %v1642 = vpop.f32.mrf.mxu0
    %1643 = vmatprep.mubr.f32.mxu0 %v1572
    %1644 = vmatmul.mubr.f32.gmra.mxu0 %v1178
    %v1645 = vpop.f32.mrf.mxu0
    %v1646 = vadd.f32 %v1565, %v1645
    %v1647 = vpop.f32.mrf.mxu0
    %1648 = vdwg.mxu0
    %vm1649 = vcmp.gt.f32.partialorder %v1641, 0.0
    %vm1650 = vcmp.gt.f32.partialorder %v1646, 0.0
    %v1651 = vmul.f32 %v1641, 0.2
    %v1652 = vmul.f32 %v1646, 0.2
    %v1653 = vsel %vm1649, %v1641, %v1651
    %v1654 = vsel %vm1650, %v1646, %v1652
    %v1655 = vld [vmem:[#allocation8] sm:$0xff]
    %v1656 = vld [vmem:[#allocation8 + $0x8] sm:$0xff]
    %v1657 = vld [vmem:[%s13] sm:$0xff]
    %v1658 = vld [vmem:[%s13 + $0x8] sm:$0xff]
    %1661 = vrot.lane.b32.xlu0 %v1653, 3
    %v1662 = vpop.permute.xlu0 %1661
    %1663 = vrot.lane.b32.xlu0 %v1654, 3
    %v1664 = vpop.permute.xlu0 %1663
    %vm1667 = vcmask 23552
    %v1668 = vsel %vm1667, 0.0, %v1662
    %v1669 = vsel %vm1667, 0.0, %v1664
    %v1670 = vsel %vm353, %v1668, 0.0
    %v1671 = vsel %vm353, %v1669, 0.0
    %1674 = vrot.lane.b32.xlu0 %v1670, 127
    %v1675 = vpop.permute.xlu0 %1674
    %1676 = vrot.lane.b32.xlu0 %v1671, 127
    %v1677 = vpop.permute.xlu0 %1676
    %1680 = vrot.lane.b32.xlu0 %v1670, 126
    %v1681 = vpop.permute.xlu0 %1680
    %1682 = vrot.lane.b32.xlu0 %v1671, 126
    %v1683 = vpop.permute.xlu0 %1682
    %1686 = vrot.lane.b32.xlu0 %v1670, 125
    %v1687 = vpop.permute.xlu0 %1686
    %1688 = vrot.lane.b32.xlu0 %v1671, 125
    %v1689 = vpop.permute.xlu0 %1688
    %1692 = vrot.lane.b32.xlu0 %v1670, 124
    %v1693 = vpop.permute.xlu0 %1692
    %1694 = vrot.lane.b32.xlu0 %v1671, 124
    %v1695 = vpop.permute.xlu0 %1694
    %1698 = vrot.lane.b32.xlu0 %v1670, 123
    %v1699 = vpop.permute.xlu0 %1698
    %1700 = vrot.lane.b32.xlu0 %v1671, 123
    %v1701 = vpop.permute.xlu0 %1700
    %1704 = vrot.lane.b32.xlu0 %v1670, 122
    %v1705 = vpop.permute.xlu0 %1704
    %1706 = vrot.lane.b32.xlu0 %v1671, 122
    %v1707 = vpop.permute.xlu0 %1706
    %1710 = vrot.lane.b32.xlu0 %v1670, 121
    %v1711 = vpop.permute.xlu0 %1710
    %1712 = vrot.lane.b32.xlu0 %v1671, 121
    %v1713 = vpop.permute.xlu0 %1712
    %1716 = vrot.lane.b32.xlu0 %v1653, 119
    %v1717 = vpop.permute.xlu0 %1716
    %1718 = vrot.lane.b32.xlu0 %v1654, 119
    %v1719 = vpop.permute.xlu0 %1718
    %v1722 = vsel %vm1667, 0.0, %v1717
    %v1723 = vsel %vm1667, 0.0, %v1719
    %v1724 = vsel %vm353, %v1722, 0.0
    %v1725 = vsel %vm353, %v1723, 0.0
    %1728 = vrot.lane.b32.xlu0 %v1724, 127
    %v1729 = vpop.permute.xlu0 %1728
    %1730 = vrot.lane.b32.xlu0 %v1725, 127
    %v1731 = vpop.permute.xlu0 %1730
    %1732 = vrot.lane.b32.xlu0 %v1724, 126
    %v1733 = vpop.permute.xlu0 %1732
    %1734 = vrot.lane.b32.xlu0 %v1725, 126
    %v1735 = vpop.permute.xlu0 %1734
    %1736 = vrot.lane.b32.xlu0 %v1724, 125
    %v1737 = vpop.permute.xlu0 %1736
    %1738 = vrot.lane.b32.xlu0 %v1725, 125
    %v1739 = vpop.permute.xlu0 %1738
    %1740 = vrot.lane.b32.xlu0 %v1724, 124
    %v1741 = vpop.permute.xlu0 %1740
    %1742 = vrot.lane.b32.xlu0 %v1725, 124
    %v1743 = vpop.permute.xlu0 %1742
    %1744 = vrot.lane.b32.xlu0 %v1724, 123
    %v1745 = vpop.permute.xlu0 %1744
    %1746 = vrot.lane.b32.xlu0 %v1725, 123
    %v1747 = vpop.permute.xlu0 %1746
    %1748 = vrot.lane.b32.xlu0 %v1724, 122
    %v1749 = vpop.permute.xlu0 %1748
    %1750 = vrot.lane.b32.xlu0 %v1725, 122
    %v1751 = vpop.permute.xlu0 %1750
    %1752 = vrot.lane.b32.xlu0 %v1724, 121
    %v1753 = vpop.permute.xlu0 %1752
    %1754 = vrot.lane.b32.xlu0 %v1725, 121
    %v1755 = vpop.permute.xlu0 %1754
    %1756 = vrot.lane.b32.xlu0 %v1724, 12
    %v1757 = vpop.permute.xlu0 %1756
    %1758 = vrot.lane.b32.xlu0 %v1725, 12
    %v1759 = vpop.permute.xlu0 %1758
    %1760 = vrot.lane.b32.xlu0 %v1729, 12
    %v1761 = vpop.permute.xlu0 %1760
    %1762 = vrot.lane.b32.xlu0 %v1731, 12
    %v1763 = vpop.permute.xlu0 %1762
    %1764 = vrot.lane.b32.xlu0 %v1733, 12
    %v1765 = vpop.permute.xlu0 %1764
    %1766 = vrot.lane.b32.xlu0 %v1735, 12
    %v1767 = vpop.permute.xlu0 %1766
    %1768 = vrot.lane.b32.xlu0 %v1737, 12
    %v1769 = vpop.permute.xlu0 %1768
    %1770 = vrot.lane.b32.xlu0 %v1739, 12
    %v1771 = vpop.permute.xlu0 %1770
    %1772 = vrot.lane.b32.xlu0 %v1741, 12
    %v1773 = vpop.permute.xlu0 %1772
    %1774 = vrot.lane.b32.xlu0 %v1743, 12
    %v1775 = vpop.permute.xlu0 %1774
    %1776 = vrot.lane.b32.xlu0 %v1745, 12
    %v1777 = vpop.permute.xlu0 %1776
    %1778 = vrot.lane.b32.xlu0 %v1747, 12
    %v1779 = vpop.permute.xlu0 %1778
    %1780 = vrot.lane.b32.xlu0 %v1749, 12
    %v1781 = vpop.permute.xlu0 %1780
    %1782 = vrot.lane.b32.xlu0 %v1751, 12
    %v1783 = vpop.permute.xlu0 %1782
    %1784 = vrot.lane.b32.xlu0 %v1753, 12
    %v1785 = vpop.permute.xlu0 %1784
    %1786 = vrot.lane.b32.xlu0 %v1755, 12
    %v1787 = vpop.permute.xlu0 %1786
    %v1804 = vsel %vm282, %v1670, %v1757
    %v1805 = vsel %vm282, %v1671, %v1759
    %v1806 = vsel %vm282, %v1675, %v1761
    %v1807 = vsel %vm282, %v1677, %v1763
    %v1808 = vsel %vm282, %v1681, %v1765
    %v1809 = vsel %vm282, %v1683, %v1767
    %v1810 = vsel %vm282, %v1687, %v1769
    %v1811 = vsel %vm282, %v1689, %v1771
    %v1812 = vsel %vm282, %v1693, %v1773
    %v1813 = vsel %vm282, %v1695, %v1775
    %v1814 = vsel %vm282, %v1699, %v1777
    %v1815 = vsel %vm282, %v1701, %v1779
    %v1816 = vsel %vm282, %v1705, %v1781
    %v1817 = vsel %vm282, %v1707, %v1783
    %v1818 = vsel %vm282, %v1711, %v1785
    %v1819 = vsel %vm282, %v1713, %v1787
    %1821 = vset.pattern.permute.xlu0 0
    %1822 = vperm.xlu0 %1821, %v1657
    %v1823 = vpop.permute.xlu0 %1822
    %1826 = vset.pattern.permute.xlu0 0
    %1827 = vperm.xlu0 %1826, %v1658
    %v1828 = vpop.permute.xlu0 %1827
    %1830 = vmatprep.subr.mxu0 0.0
    %1831 = vmatpush1.msra.mxu0 %v1819
    %1832 = vmatprep.subr.mxu0 0.0
    %1833 = vmatpush1.msra.mxu0 %v1818
    %1834 = vmatprep.subr.mxu0 0.0
    %1835 = vmatpush1.msra.mxu0 %v1817
    %1836 = vmatprep.subr.mxu0 0.0
    %1837 = vmatpush1.msra.mxu0 %v1816
    %1838 = vmatprep.subr.mxu0 0.0
    %1839 = vmatpush1.msra.mxu0 %v1815
    %1840 = vmatprep.subr.mxu0 0.0
    %1841 = vmatpush1.msra.mxu0 %v1814
    %1842 = vmatprep.subr.mxu0 0.0
    %1843 = vmatpush1.msra.mxu0 %v1813
    %1844 = vmatprep.subr.mxu0 0.0
    %1845 = vmatpush1.msra.mxu0 %v1812
    %1846 = vmatprep.subr.mxu0 0.0
    %1847 = vmatpush1.msra.mxu0 %v1811
    %1848 = vmatprep.subr.mxu0 0.0
    %1849 = vmatpush1.msra.mxu0 %v1810
    %1850 = vmatprep.subr.mxu0 0.0
    %1851 = vmatpush1.msra.mxu0 %v1809
    %1852 = vmatprep.subr.mxu0 0.0
    %1853 = vmatpush1.msra.mxu0 %v1808
    %1854 = vmatprep.subr.mxu0 0.0
    %1855 = vmatpush1.msra.mxu0 %v1807
    %1856 = vmatprep.subr.mxu0 0.0
    %1857 = vmatpush1.msra.mxu0 %v1806
    %1858 = vmatprep.subr.mxu0 0.0
    %1859 = vmatpush1.msra.mxu0 %v1805
    %1860 = vmatprep.subr.mxu0 0.0
    %1861 = vmatpush1.msra.mxu0 %v1804
    %1862 = vmatprep.subr.mxu0 0.0
    %1863 = vmatpush2.msra.mxu0 0.0
    %1864 = vmatprep.subr.mxu0 0.0
    %1865 = vmatpush2.msra.mxu0 0.0
    %1866 = vmatprep.subr.mxu0 0.0
    %1867 = vmatpush2.msra.mxu0 0.0
    %1868 = vmatprep.subr.mxu0 0.0
    %1869 = vmatpush2.msra.mxu0 0.0
    %1870 = vmatprep.subr.mxu0 0.0
    %1871 = vmatpush2.msra.mxu0 0.0
    %1872 = vmatprep.subr.mxu0 0.0
    %1873 = vmatpush2.msra.mxu0 0.0
    %1874 = vmatprep.subr.mxu0 0.0
    %1875 = vmatpush2.msra.mxu0 0.0
    %1876 = vmatprep.subr.mxu0 0.0
    %1877 = vmatpush2.msra.mxu0 0.0
    %1878 = vmatprep.subr.mxu0 0.0
    %1879 = vmatpush2.msra.mxu0 0.0
    %1880 = vmatprep.subr.mxu0 0.0
    %1881 = vmatpush2.msra.mxu0 0.0
    %1882 = vmatprep.subr.mxu0 0.0
    %1883 = vmatpush2.msra.mxu0 0.0
    %1884 = vmatprep.subr.mxu0 0.0
    %1885 = vmatpush2.msra.mxu0 0.0
    %1886 = vmatprep.subr.mxu0 0.0
    %1887 = vmatpush2.msra.mxu0 0.0
    %1888 = vmatprep.subr.mxu0 0.0
    %1889 = vmatpush2.msra.mxu0 0.0
    %1890 = vmatprep.subr.mxu0 0.0
    %1891 = vmatpush2.msra.mxu0 0.0
    %1892 = vmatprep.subr.mxu0 0.0
    %1893 = vmatpush2.msra.mxu0 0.0
    %1894 = vmatprep.mubr.f32.mxu0 0.0
    %1895 = vmatmul.mubr.f32.gmra.mxu0 %v1655
    %v1896 = vpop.f32.mrf.mxu0
    %v1897 = vadd.f32 %v1823, %v1896
    %v1898 = vpop.f32.mrf.mxu0
    %1899 = vmatprep.mubr.f32.mxu0 0.0
    %1900 = vmatmul.mubr.f32.gmra.mxu0 %v1656
    %v1901 = vpop.f32.mrf.mxu0
    %v1902 = vadd.f32 %v1828, %v1901
    %v1903 = vpop.f32.mrf.mxu0
    %1904 = vdwg.mxu0
    %vm1905 = vcmask 31744
    %v1906 = vsel %vm1905, %v1897, -inf
    %1907 = vmax.xlane.f32.xlu0 %v1906
    %v1908 = vpop.xlane.xlu0 %1907
    %v1909 = vsel %vm1905, %v1902, -inf
    %1910 = vmax.xlane.f32.xlu0 %v1909
    %v1911 = vpop.xlane.xlu0 %1910
    %vm1912 = vcmask 64544
    %v1913 = vsel %vm1912, %v1897, -inf
    %1914 = vmax.xlane.f32.xlu0 %v1913
    %v1915 = vpop.xlane.xlu0 %1914
    %v1916 = vsel %vm1912, %v1902, -inf
    %1917 = vmax.xlane.f32.xlu0 %v1916
    %v1918 = vpop.xlane.xlu0 %1917
    %vm1919 = vcmask 97344
    %v1920 = vsel %vm1919, %v1897, -inf
    %1921 = vmax.xlane.f32.xlu0 %v1920
    %v1922 = vpop.xlane.xlu0 %1921
    %v1923 = vsel %vm1919, %v1902, -inf
    %1924 = vmax.xlane.f32.xlu0 %v1923
    %v1925 = vpop.xlane.xlu0 %1924
    %vm1926 = vcmask 130144
    %v1927 = vsel %vm1926, %v1897, -inf
    %1928 = vmax.xlane.f32.xlu0 %v1927
    %v1929 = vpop.xlane.xlu0 %1928
    %v1930 = vsel %vm1926, %v1902, -inf
    %1931 = vmax.xlane.f32.xlu0 %v1930
    %v1932 = vpop.xlane.xlu0 %1931
    %vm1933 = vcmask 162944
    %v1934 = vsel %vm1933, %v1897, -inf
    %1935 = vmax.xlane.f32.xlu0 %v1934
    %v1936 = vpop.xlane.xlu0 %1935
    %v1937 = vsel %vm1933, %v1902, -inf
    %1938 = vmax.xlane.f32.xlu0 %v1937
    %v1939 = vpop.xlane.xlu0 %1938
    %vm1940 = vcmask 195744
    %v1941 = vsel %vm1940, %v1897, -inf
    %1942 = vmax.xlane.f32.xlu0 %v1941
    %v1943 = vpop.xlane.xlu0 %1942
    %v1944 = vsel %vm1940, %v1902, -inf
    %1945 = vmax.xlane.f32.xlu0 %v1944
    %v1946 = vpop.xlane.xlu0 %1945
    %vm1947 = vcmask 7168
    %v1948 = vsel %vm1947, %v1908, %v1915
    %v1949 = vsel %vm1947, %v1911, %v1918
    %vm1950 = vcmask 15360
    %v1951 = vsel %vm1950, %v1948, %v1922
    %v1952 = vsel %vm1950, %v1949, %v1925
    %v1953 = vsel %vm1667, %v1951, %v1929
    %v1954 = vsel %vm1667, %v1952, %v1932
    %v1955 = vsel %vm1905, %v1953, %v1936
    %v1956 = vsel %vm1905, %v1954, %v1939
    %vm1957 = vcmask 39936
    %v1958 = vsel %vm1957, %v1955, %v1943
    %v1959 = vsel %vm1957, %v1956, %v1946
    %v1961 = vrot.slane %v1958, 1
    %1962 = vrot.lane.b32.xlu0 %v1961, 3
    %v1963 = vpop.permute.xlu0 %1962
    %v1965 = vrot.slane %v1958, 2
    %1966 = vrot.lane.b32.xlu0 %v1965, 6
    %v1967 = vpop.permute.xlu0 %1966
    %v1969 = vrot.slane %v1958, 3
    %1970 = vrot.lane.b32.xlu0 %v1969, 9
    %v1971 = vpop.permute.xlu0 %1970
    %v1973 = vrot.slane %v1958, 4
    %1974 = vrot.lane.b32.xlu0 %v1973, 12
    %v1975 = vpop.permute.xlu0 %1974
    %v1977 = vrot.slane %v1958, 5
    %1978 = vrot.lane.b32.xlu0 %v1977, 15
    %v1979 = vpop.permute.xlu0 %1978
    %v1981 = vrot.slane %v1958, 6
    %1982 = vrot.lane.b32.xlu0 %v1981, 18
    %v1983 = vpop.permute.xlu0 %1982
    %v1985 = vrot.slane %v1958, 7
    %1986 = vrot.lane.b32.xlu0 %v1985, 21
    %v1987 = vpop.permute.xlu0 %1986
    %1990 = vrot.lane.b32.xlu0 %v1959, 24
    %v1991 = vpop.permute.xlu0 %1990
    %v1993 = vrot.slane %v1959, 1
    %1994 = vrot.lane.b32.xlu0 %v1993, 27
    %v1995 = vpop.permute.xlu0 %1994
    %v1997 = vrot.slane %v1959, 2
    %1998 = vrot.lane.b32.xlu0 %v1997, 30
    %v1999 = vpop.permute.xlu0 %1998
    %v2001 = vrot.slane %v1959, 3
    %2002 = vrot.lane.b32.xlu0 %v2001, 33
    %v2003 = vpop.permute.xlu0 %2002
    %v2005 = vrot.slane %v1959, 4
    %2006 = vrot.lane.b32.xlu0 %v2005, 36
    %v2007 = vpop.permute.xlu0 %2006
    %v2009 = vrot.slane %v1959, 5
    %2010 = vrot.lane.b32.xlu0 %v2009, 39
    %v2011 = vpop.permute.xlu0 %2010
    %v2013 = vrot.slane %v1959, 6
    %2014 = vrot.lane.b32.xlu0 %v2013, 42
    %v2015 = vpop.permute.xlu0 %2014
    %v2017 = vrot.slane %v1959, 7
    %2018 = vrot.lane.b32.xlu0 %v2017, 45
    %v2019 = vpop.permute.xlu0 %2018
    %v2021 = vsel %vm1667, %v1958, %v1963
    %vm2022 = vcmask 48128
    %v2023 = vsel %vm2022, %v2021, %v1967
    %v2024 = vsel %vm1190, %v2023, %v1971
    %v2025 = vsel %vm282, %v2024, %v1975
    %v2026 = vsel %vm353, %v2025, %v1979
    %vm2027 = vcmask 146432
    %v2028 = vsel %vm2027, %v2026, %v1983
    %v2029 = vsel %vm1193, %v2028, %v1987
    %v2030 = vsel %vm682, %v2029, %v1991
    %v2031 = vsel %vm355, %v2030, %v1995
    %vm2032 = vcmask 244736
    %v2033 = vsel %vm2032, %v2031, %v1999
    %vm2034 = vcmask 269312
    %v2035 = vsel %vm2034, %v2033, %v2003
    %v2036 = vsel %vm684, %v2035, %v2007
    %vm2037 = vcmask 318464
    %v2038 = vsel %vm2037, %v2036, %v2011
    %vm2039 = vcmask 343040
    %v2040 = vsel %vm2039, %v2038, %v2015
    %vm2041 = vcmask 367616
    %v2042 = vsel %vm2041, %v2040, %v2019
    %2043 = vrot.lane.b32.xlu0 %v1958, 125
    %v2044 = vpop.permute.xlu0 %2043
    %2047 = vrot.lane.b32.xlu0 %v1965, 3
    %v2048 = vpop.permute.xlu0 %2047
    %2050 = vrot.lane.b32.xlu0 %v1969, 6
    %v2051 = vpop.permute.xlu0 %2050
    %2053 = vrot.lane.b32.xlu0 %v1973, 9
    %v2054 = vpop.permute.xlu0 %2053
    %2056 = vrot.lane.b32.xlu0 %v1977, 12
    %v2057 = vpop.permute.xlu0 %2056
    %2059 = vrot.lane.b32.xlu0 %v1981, 15
    %v2060 = vpop.permute.xlu0 %2059
    %2062 = vrot.lane.b32.xlu0 %v1985, 18
    %v2063 = vpop.permute.xlu0 %2062
    %2065 = vrot.lane.b32.xlu0 %v1959, 21
    %v2066 = vpop.permute.xlu0 %2065
    %2068 = vrot.lane.b32.xlu0 %v1993, 24
    %v2069 = vpop.permute.xlu0 %2068
    %2071 = vrot.lane.b32.xlu0 %v1997, 27
    %v2072 = vpop.permute.xlu0 %2071
    %2074 = vrot.lane.b32.xlu0 %v2001, 30
    %v2075 = vpop.permute.xlu0 %2074
    %2077 = vrot.lane.b32.xlu0 %v2005, 33
    %v2078 = vpop.permute.xlu0 %2077
    %2080 = vrot.lane.b32.xlu0 %v2009, 36
    %v2081 = vpop.permute.xlu0 %2080
    %2083 = vrot.lane.b32.xlu0 %v2013, 39
    %v2084 = vpop.permute.xlu0 %2083
    %2086 = vrot.lane.b32.xlu0 %v2017, 42
    %v2087 = vpop.permute.xlu0 %2086
    %v2089 = vsel %vm1667, %v2044, %v1961
    %v2090 = vsel %vm2022, %v2089, %v2048
    %v2091 = vsel %vm1190, %v2090, %v2051
    %v2092 = vsel %vm282, %v2091, %v2054
    %v2093 = vsel %vm353, %v2092, %v2057
    %v2094 = vsel %vm2027, %v2093, %v2060
    %v2095 = vsel %vm1193, %v2094, %v2063
    %v2096 = vsel %vm682, %v2095, %v2066
    %v2097 = vsel %vm355, %v2096, %v2069
    %v2098 = vsel %vm2032, %v2097, %v2072
    %v2099 = vsel %vm2034, %v2098, %v2075
    %v2100 = vsel %vm684, %v2099, %v2078
    %v2101 = vsel %vm2037, %v2100, %v2081
    %v2102 = vsel %vm2039, %v2101, %v2084
    %v2103 = vsel %vm2041, %v2102, %v2087
    %v2105 = vrot.slane %v2103, 7
    %v2107 = vsel %vm312, %v2042, %v2105
    %vm2108 = vcmp.gt.f32.partialorder %v2107, 0.0
    %v2109 = vmul.f32 %v2107, 0.2
    %v2110 = vsel %vm2108, %v2107, %v2109
    %v2111 = vld [vmem:[#allocation10] sm:$0xff]
    %v2112 = vld [vmem:[#allocation10 + $0x8] sm:$0xff]
    %v2113 = vld [vmem:[#allocation10 + $0x10] sm:$0xff]
    %v2114 = vld [vmem:[#allocation10 + $0x18] sm:$0xff]
    %v2115 = vld [vmem:[#allocation10 + $0x20] sm:$0xff]
    %v2116 = vld [vmem:[#allocation10 + $0x28] sm:$0xff]
    %v2118 = vsel %vm716, %v2110, 0
    %2120 = vmatprep.subr.mxu0 0.0
    %2121 = vmatpush1.msra.mxu0 0.0
    %2122 = vmatprep.subr.mxu0 0.0
    %2123 = vmatpush1.msra.mxu0 0.0
    %2124 = vmatprep.subr.mxu0 0.0
    %2125 = vmatpush1.msra.mxu0 0.0
    %2126 = vmatprep.subr.mxu0 0.0
    %2127 = vmatpush1.msra.mxu0 0.0
    %2128 = vmatprep.subr.mxu0 0.0
    %2129 = vmatpush1.msra.mxu0 0.0
    %2130 = vmatprep.subr.mxu0 0.0
    %2131 = vmatpush1.msra.mxu0 0.0
    %2132 = vmatprep.subr.mxu0 0.0
    %2133 = vmatpush1.msra.mxu0 0.0
    %2134 = vmatprep.subr.mxu0 0.0
    %2135 = vmatpush1.msra.mxu0 0.0
    %2136 = vmatprep.subr.mxu0 0.0
    %2137 = vmatpush1.msra.mxu0 0.0
    %2138 = vmatprep.subr.mxu0 0.0
    %2139 = vmatpush1.msra.mxu0 0.0
    %2140 = vmatprep.subr.mxu0 0.0
    %2141 = vmatpush1.msra.mxu0 %v2116
    %2142 = vmatprep.subr.mxu0 0.0
    %2143 = vmatpush1.msra.mxu0 %v2115
    %2144 = vmatprep.subr.mxu0 0.0
    %2145 = vmatpush1.msra.mxu0 %v2114
    %2146 = vmatprep.subr.mxu0 0.0
    %2147 = vmatpush1.msra.mxu0 %v2113
    %2148 = vmatprep.subr.mxu0 0.0
    %2149 = vmatpush1.msra.mxu0 %v2112
    %2150 = vmatprep.subr.mxu0 0.0
    %2151 = vmatpush1.msra.mxu0 %v2111
    %2152 = vmatprep.subr.mxu0 0.0
    %2153 = vmatpush2.msra.mxu0 0.0
    %2154 = vmatprep.subr.mxu0 0.0
    %2155 = vmatpush2.msra.mxu0 0.0
    %2156 = vmatprep.subr.mxu0 0.0
    %2157 = vmatpush2.msra.mxu0 0.0
    %2158 = vmatprep.subr.mxu0 0.0
    %2159 = vmatpush2.msra.mxu0 0.0
    %2160 = vmatprep.subr.mxu0 0.0
    %2161 = vmatpush2.msra.mxu0 0.0
    %2162 = vmatprep.subr.mxu0 0.0
    %2163 = vmatpush2.msra.mxu0 0.0
    %2164 = vmatprep.subr.mxu0 0.0
    %2165 = vmatpush2.msra.mxu0 0.0
    %2166 = vmatprep.subr.mxu0 0.0
    %2167 = vmatpush2.msra.mxu0 0.0
    %2168 = vmatprep.subr.mxu0 0.0
    %2169 = vmatpush2.msra.mxu0 0.0
    %2170 = vmatprep.subr.mxu0 0.0
    %2171 = vmatpush2.msra.mxu0 0.0
    %2172 = vmatprep.subr.mxu0 0.0
    %2173 = vmatpush2.msra.mxu0 0.0
    %2174 = vmatprep.subr.mxu0 0.0
    %2175 = vmatpush2.msra.mxu0 0.0
    %2176 = vmatprep.subr.mxu0 0.0
    %2177 = vmatpush2.msra.mxu0 0.0
    %2178 = vmatprep.subr.mxu0 0.0
    %2179 = vmatpush2.msra.mxu0 0.0
    %2180 = vmatprep.subr.mxu0 0.0
    %2181 = vmatpush2.msra.mxu0 0.0
    %2182 = vmatprep.subr.mxu0 0.0
    %2183 = vmatpush2.msra.mxu0 0.0
    %2184 = vmatprep.mubr.f32.mxu0 0.0
    %2185 = vmatmul.mubr.f32.gmra.mxu0 %v2118
    %v2186 = vpop.f32.mrf.mxu0
    %v2187 = vadd.f32 0.0, %v2186
    %v2188 = vpop.f32.mrf.mxu0
    %2189 = vdwg.mxu0
    %vm2190 = vcmask 386048
    %2191 = vst.msk [vmem:[#allocation11] sm:$0x3] %vm2190, %v2187
    // Predicated region
    $region82: #{generator_forward.1} parent=1 // pred_check
      _
    $region83: #{generator_forward.1} parent=1 // pred_check_branch
      %2193 = sbr.rel (0) target = $region85
    $region84: #{generator_forward.1} parent=1 // pred_region
      %s2195 = ssub.s32 32, 32
      %2196 = vsyncadd [#allocation4], %s2195
      %s2198 = sshll.u32 [#allocation11], 4
      %s2199 = int_to_ptr.vmem [resolvable:$true] %s2198
      %2201 = dma.vmem_to_hbm [thread:$0]  %s2199, 32, %s15, [#allocation4]
    $region85: #{generator_forward.1} parent=1 // pred_fallthru
      _
    // Predicated region
    $region86: #{generator_forward.1} parent=1 // pred_check
      _
    $region87: #{generator_forward.1} parent=1 // pred_check_branch
      %2203 = sbr.rel (0) target = $region89
    $region88: #{generator_forward.1} parent=1 // pred_region
      %2204 = dma.done [#allocation4], 32
    $region89: #{generator_forward.1} parent=1 // pred_fallthru
      _
    %2205 = vsyncpa [#allocation3], 1
    %2206 = vsyncpa [#allocation6], 1
    %2207 = vsyncpa [#allocation9], 1
    %2208 = vsyncpa [#allocation4], 1

</llo_original>
